<compile_context>
chip_gen: v5e
topology: v5e:2x2
jax: 0.10.0
libtpu: 0.0.40
codegen_flags: <defaults>
</compile_context>

<pallas_src>
import functools

import jax
import jax.numpy as jnp
from jax import lax
from jax.experimental import pallas as pl
from jax.experimental.pallas import tpu as pltpu


_LANE = 128
_VMEM_LIMIT = 32 * 1024 * 1024   # well above actual footprint; safe on v7x (64 MiB/TC)


def _cdiv(a, b):
    return -(-a // b)


def _round_up(x, m):
    return _cdiv(x, m) * m


# ----------------------------------------------------------------------------
# Pallas kernels
# ----------------------------------------------------------------------------
def _mm_bias_act_kernel(x_ref, w_ref, b_ref, o_ref, *, act):
    """o = act(x @ w + b) for one (tile_m, K) row tile; f32 MXU accumulation."""
    acc = jnp.dot(x_ref[...], w_ref[...], preferred_element_type=jnp.float32)
    acc = acc + b_ref[...]
    if act == "relu":
        acc = jnp.maximum(acc, 0.0)
    elif act == "lrelu":
        acc = jnp.where(acc > 0.0, acc, 0.01 * acc)
    o_ref[...] = acc.astype(o_ref.dtype)


def _conv3_fc_head_kernel(p_ref, w3_ref, b3_ref, wfc_ref, bfc_ref,
                          wh_ref, bh_ref, q_ref):
    """Fused conv3 (3x3) + fc (3136->512, LeakyReLU 0.01) + packed head.

    p_ref  : (49, tile_b, 576) bf16 conv3 im2col patches, spatial-major.
    w3_ref : (576, 64) bf16, b3_ref: (1, 64) f32.
    wfc_ref: (49, 64, 512) bf16 fc weight grouped by conv3 spatial position,
             bfc_ref: (1, 512) f32.
    wh_ref : (512, 128) bf16 packed head (cols [0,A) = head/adv, col A = value),
             bh_ref: (1, 128) f32.

    The (tile_b, 3136) conv3 activation never leaves VMEM: the fc contraction
    is a fori_loop over the 49 spatial positions accumulating h in f32, so no
    in-kernel reshape / relayout is required.
    """
    n_spatial = p_ref.shape[0]
    tile_b = p_ref.shape[1]
    n_hidden = bfc_ref.shape[1]

    def body(s, h):
        y = jnp.dot(p_ref[s], w3_ref[...],
                    preferred_element_type=jnp.float32)           # conv3 matmul
        y = jnp.maximum(y + b3_ref[...], 0.0)                     # bias + ReLU
        return h + jnp.dot(y.astype(jnp.bfloat16), wfc_ref[s],
                           preferred_element_type=jnp.float32)    # fc partial

    h = lax.fori_loop(0, n_spatial, body,
                      jnp.zeros((tile_b, n_hidden), jnp.float32))
    h = h + bfc_ref[...]
    h = jnp.where(h > 0.0, h, 0.01 * h)                           # LeakyReLU(0.01)
    q = jnp.dot(h.astype(jnp.bfloat16), wh_ref[...],
                preferred_element_type=jnp.float32) + bh_ref[...]
    q_ref[...] = q.astype(q_ref.dtype)


# ----------------------------------------------------------------------------
# Pallas wrappers
# ----------------------------------------------------------------------------
def _pick_row_tiling(M, cap=1024, granule=16):
    """(tile_m, n_tiles, padded_M) minimizing pad waste.

    Single full-extent block when M fits one tile (no (8,128) constraint, no
    padding); otherwise near-equal tiles rounded to `granule`.  A free 2-way
    split is taken when it introduces no padding so v7x megacore has work.
    """
    n = max(1, _cdiv(M, cap))
    if n == 1 and M >= 2 * granule and M % (2 * granule) == 0:
        n = 2
    if n == 1:
        return M, 1, M
    tile = _round_up(_cdiv(M, n), granule)
    n = _cdiv(M, tile)
    return tile, n, tile * n


def linear_tiled(x, w, b_row, act="relu", out_dtype=jnp.bfloat16):
    """act(x @ w + b).  x:(M,K) bf16, w:(K,N) bf16, b_row:(1,N) f32.

    Grid over M row tiles -> double-buffered pipeline; weights/bias blocks are
    grid-invariant (stay resident in VMEM); grid axis "parallel" for megacore.
    """
    M, K = x.shape
    K2, N = w.shape
    assert K == K2
    tile_m, n_tiles, m_pad = _pick_row_tiling(M)
    if m_pad != M:
        x = jnp.pad(x, ((0, m_pad - M), (0, 0)))

    out = pl.pallas_call(
        functools.partial(_mm_bias_act_kernel, act=act),
        out_shape=jax.ShapeDtypeStruct((m_pad, N), out_dtype),
        grid=(n_tiles,),
        in_specs=[
            pl.BlockSpec((tile_m, K), lambda i: (i, 0)),
            pl.BlockSpec((K, N), lambda i: (0, 0)),
            pl.BlockSpec((1, N), lambda i: (0, 0)),
        ],
        out_specs=pl.BlockSpec((tile_m, N), lambda i: (i, 0)),
        compiler_params=pltpu.CompilerParams(
            dimension_semantics=("parallel",),
            vmem_limit_bytes=_VMEM_LIMIT,
        ),
    )(x, w, b_row)
    # Padded rows (= relu(bias)) are sliced off before they can leak into the
    # next layer's im2col.  With the tiling above this is not hit at small B.
    return out[:M] if m_pad != M else out


def conv3_fc_head_pallas(patches, w3, b3, wfc, bfc, wh, bh, tile_b_cap=64):
    """Fused conv3+fc+head.  patches:(49, B, 576) bf16 -> (B, 128) f32 raw q."""
    S, B, K3 = patches.shape
    O3 = w3.shape[1]
    F = wfc.shape[2]
    NH = wh.shape[1]
    if B <= tile_b_cap:
        tile_b, nb, b_pad = B, 1, B
    else:
        tile_b = tile_b_cap                      # multiple of 8
        nb = _cdiv(B, tile_b)
        b_pad = nb * tile_b
        if b_pad != B:
            patches = jnp.pad(patches, ((0, 0), (0, b_pad - B), (0, 0)))

    q = pl.pallas_call(
        _conv3_fc_head_kernel,
        out_shape=jax.ShapeDtypeStruct((b_pad, NH), jnp.float32),
        grid=(nb,),
        in_specs=[
            pl.BlockSpec((S, tile_b, K3), lambda i: (0, i, 0)),
            pl.BlockSpec((K3, O3), lambda i: (0, 0)),
            pl.BlockSpec((1, O3), lambda i: (0, 0)),
            pl.BlockSpec((S, O3, F), lambda i: (0, 0, 0)),
            pl.BlockSpec((1, F), lambda i: (0, 0)),
            pl.BlockSpec((F, NH), lambda i: (0, 0)),
            pl.BlockSpec((1, NH), lambda i: (0, 0)),
        ],
        out_specs=pl.BlockSpec((tile_b, NH), lambda i: (i, 0)),
        compiler_params=pltpu.CompilerParams(
            dimension_semantics=("parallel",),
            vmem_limit_bytes=_VMEM_LIMIT,
        ),
    )(patches, w3, b3, wfc, bfc, wh, bh)
    return q[:B] if b_pad != B else q


# ----------------------------------------------------------------------------
# Plain-JAX glue: space-to-depth + lane-dense im2col
# ----------------------------------------------------------------------------
def _nchw_to_s2d(x_nchw, r):
    """NCHW -> space-to-depth(r) NHWC, bf16.  Output channel order (dh, dw, c)."""
    B, C, H, W = x_nchw.shape
    x = x_nchw.astype(jnp.bfloat16).reshape(B, C, H // r, r, W // r, r)
    x = jnp.transpose(x, (0, 2, 4, 3, 5, 1))             # (B, H/r, W/r, r, r, C)
    return x.reshape(B, H // r, W // r, r * r * C)


def _space_to_depth(x_nhwc, r):
    """NHWC space-to-depth(r).  Output channel order (dh, dw, c)."""
    B, H, W, C = x_nhwc.shape
    x = x_nhwc.reshape(B, H // r, r, W // r, r, C)
    x = jnp.transpose(x, (0, 1, 3, 2, 4, 5))
    return x.reshape(B, H // r, W // r, r * r * C)


def _im2col(x_nhwc, kh, kw, stride):
    """Extract patches; last-axis order [kh, kw, c] matching the weight pack."""
    B, H, W, C = x_nhwc.shape
    oh = (H - kh) // stride + 1
    ow = (W - kw) // stride + 1
    pieces = [
        x_nhwc[:, i:i + stride * oh:stride, j:j + stride * ow:stride, :]
        for i in range(kh) for j in range(kw)
    ]
    patches = jnp.concatenate(pieces, axis=-1)            # (B, oh, ow, kh*kw*C)
    return patches.reshape(B * oh * ow, kh * kw * C), oh, ow


def conv2d_pallas(x_nhwc, w_mat, b_row, kh, kw, stride):
    """x_nhwc bf16, w_mat:(kh*kw*Cin, O) bf16 pre-packed, b_row:(1, O) f32."""
    B = x_nhwc.shape[0]
    O = w_mat.shape[1]
    patches, oh, ow = _im2col(x_nhwc, kh, kw, stride)
    y = linear_tiled(patches, w_mat, b_row, act="relu", out_dtype=jnp.bfloat16)
    return y.reshape(B, oh, ow, O)


def _conv3_patches_smajor(x2):
    """(B, 9, 9, 64) conv2 output -> (49, B, 576) spatial-major conv3 patches."""
    B = x2.shape[0]
    x2t = jnp.transpose(x2, (1, 2, 0, 3))                 # (9, 9, B, 64)
    pieces = [x2t[i:i + 7, j:j + 7] for i in range(3) for j in range(3)]
    patches = jnp.concatenate(pieces, axis=-1)            # (7, 7, B, 576)
    return patches.reshape(49, B, 9 * 64)


# ----------------------------------------------------------------------------
# Parameters: PyTorch-layout init + one-time packing for the Pallas path
# ----------------------------------------------------------------------------
def init_dqn_params(key, channels, num_actions, duel_net=False):
    """PyTorch-default-style init: U(-1/sqrt(fan_in), 1/sqrt(fan_in))."""
    def uni(k, shape, fan_in):
        bound = 1.0 / float(fan_in) ** 0.5
        return jax.random.uniform(k, shape, jnp.float32, -bound, bound)

    ks = jax.random.split(key, 14)
    p = {
        "conv1_w": uni(ks[0], (32, channels, 8, 8), channels * 8 * 8),
        "conv1_b": uni(ks[1], (32,), channels * 8 * 8),
        "conv2_w": uni(ks[2], (64, 32, 4, 4), 32 * 4 * 4),
        "conv2_b": uni(ks[3], (64,), 32 * 4 * 4),
        "conv3_w": uni(ks[4], (64, 64, 3, 3), 64 * 3 * 3),
        "conv3_b": uni(ks[5], (64,), 64 * 3 * 3),
        "fc_w":    uni(ks[6], (512, 7 * 7 * 64), 7 * 7 * 64),
        "fc_b":    uni(ks[7], (512,), 7 * 7 * 64),
        "head_w":  uni(ks[8], (num_actions, 512), 512),
        "head_b":  uni(ks[9], (num_actions,), 512),
    }
    if duel_net:
        p["value_w"] = uni(ks[10], (1, 512), 512)
        p["value_b"] = uni(ks[11], (1,), 512)
        p["adv_w"] = uni(ks[12], (num_actions, 512), 512)
        p["adv_b"] = uni(ks[13], (num_actions,), 512)
    return p


def pack_params(p, num_actions, duel_net=False):
    """One-time repack of PyTorch-layout params into matmul-ready bf16 tensors."""
    packed = {}

    # conv1 (32, C, 8, 8) OIHW -> space-to-depth(4) 2x2 layout (2*2*4*4*C, 32).
    w1 = p["conv1_w"]
    O1, C1 = w1.shape[0], w1.shape[1]
    w1 = w1.reshape(O1, C1, 2, 4, 2, 4)                   # (o, c, p, dh4, q, dw4)
    w1 = jnp.transpose(w1, (2, 4, 3, 5, 1, 0))            # (p, q, dh4, dw4, c, o)
    packed["c1_w"] = w1.reshape(64 * C1, O1).astype(jnp.bfloat16)
    packed["c1_b"] = p["conv1_b"].reshape(1, O1).astype(jnp.float32)

    # conv2 (64, 32, 4, 4) -> space-to-depth(2) 2x2 layout (2*2*2*2*32, 64).
    w2 = p["conv2_w"]
    O2, C2 = w2.shape[0], w2.shape[1]
    w2 = w2.reshape(O2, C2, 2, 2, 2, 2)                   # (o, c, a, p, b, q)
    w2 = jnp.transpose(w2, (2, 4, 3, 5, 1, 0))            # (a, b, p, q, c, o)
    packed["c2_w"] = w2.reshape(16 * C2, O2).astype(jnp.bfloat16)
    packed["c2_b"] = p["conv2_b"].reshape(1, O2).astype(jnp.float32)

    # conv3 (64, 64, 3, 3) -> (3*3*64, 64) in [kh, kw, c] row order.
    w3 = p["conv3_w"]
    O3, C3, KH, KW = w3.shape
    packed["c3_w"] = jnp.transpose(w3, (2, 3, 1, 0)).reshape(
        KH * KW * C3, O3).astype(jnp.bfloat16)
    packed["c3_b"] = p["conv3_b"].reshape(1, O3).astype(jnp.float32)

    # fc: PyTorch flattens conv3 output in (C=64, H=7, W=7) order; group the
    # 3136 input features by conv3 spatial position s = h*7 + w -> (49, 64, 512)
    # so the fused kernel can contract per spatial position (no flatten needed).
    fc_w = p["fc_w"].reshape(512, 64, 49)                 # (f, c, s)
    packed["fc_w"] = jnp.transpose(fc_w, (2, 1, 0)).astype(jnp.bfloat16)
    packed["fc_b"] = p["fc_b"].reshape(1, 512).astype(jnp.float32)

    # Head (or value||advantage) packed into one lane-dense 128-wide matrix:
    #   cols [0, A) = head / advantage, col A = value (dueling only).
    assert num_actions + 1 <= _LANE
    wh = jnp.zeros((512, _LANE), jnp.float32)
    bh = jnp.zeros((1, _LANE), jnp.float32)
    if duel_net:
        wh = wh.at[:, :num_actions].set(p["adv_w"].T)
        wh = wh.at[:, num_actions].set(p["value_w"][0])
        bh = bh.at[0, :num_actions].set(p["adv_b"])
        bh = bh.at[0, num_actions].set(p["value_b"][0])
    else:
        wh = wh.at[:, :num_actions].set(p["head_w"].T)
        bh = bh.at[0, :num_actions].set(p["head_b"])
    packed["head_w"] = wh.astype(jnp.bfloat16)
    packed["head_b"] = bh
    return packed


# ----------------------------------------------------------------------------
# Forward pass (Pallas) and pure-JAX reference
# ----------------------------------------------------------------------------
def dqn_forward(packed, x_nchw, num_actions, duel_net=False):
    """Pallas-backed forward.  x_nchw: (B, C, 84, 84) float32 -> (B, A) f32."""
    # conv1: 8x8 stride-4 == space-to-depth(4) + 2x2 stride-1 (lane-dense im2col)
    x = _nchw_to_s2d(x_nchw, 4)                                     # (B,21,21,16C)
    x = conv2d_pallas(x, packed["c1_w"], packed["c1_b"], 2, 2, 1)   # (B,20,20,32)
    # conv2: 4x4 stride-2 == space-to-depth(2) + 2x2 stride-1
    x = _space_to_depth(x, 2)                                       # (B,10,10,128)
    x = conv2d_pallas(x, packed["c2_w"], packed["c2_b"], 2, 2, 1)   # (B,9,9,64)
    # conv3 + fc + head fused in one pallas_call (no (B,3136) HBM round trip).
    patches = _conv3_patches_smajor(x)                              # (49,B,576)
    q_raw = conv3_fc_head_pallas(patches,
                                 packed["c3_w"], packed["c3_b"],
                                 packed["fc_w"], packed["fc_b"],
                                 packed["head_w"], packed["head_b"])
    if duel_net:
        adv = q_raw[:, :num_actions]
        value = q_raw[:, num_actions:num_actions + 1]
        return value + adv - jnp.mean(adv)   # GLOBAL mean, exactly as the module
    return q_raw[:, :num_actions]


def dqn_reference(params, x_nchw, duel_net=False):
    """Mirrors the PyTorch forward exactly (f32, raw PyTorch-layout params)."""
    def conv(x, w, b, s):
        y = lax.conv_general_dilated(
            x, w, (s, s), "VALID", dimension_numbers=("NCHW", "OIHW", "NCHW"))
        return jnp.maximum(y + b.reshape(1, -1, 1, 1), 0.0)

    x = conv(x_nchw, params["conv1_w"], params["conv1_b"], 4)
    x = conv(x, params["conv2_w"], params["conv2_b"], 2)
    x = conv(x, params["conv3_w"], params["conv3_b"], 1)
    B = x.shape[0]
    h = x.reshape(B, -1) @ params["fc_w"].T + params["fc_b"]
    h = jnp.where(h > 0, h, 0.01 * h)
    if duel_net:
        value = h @ params["value_w"].T + params["value_b"]
        adv = h @ params["adv_w"].T + params["adv_b"]
        return value + adv - jnp.mean(adv)       # module uses advantage.mean()
    return h @ params["head_w"].T + params["head_b"]


if __name__ == "__main__":
    B, C, H, W = 2, 4, 84, 84   # 84x84 is implied by fc = Linear(7*7*64, 512)
    NUM_ACTIONS = 6

    key = jax.random.PRNGKey(0)
    k_x, k_p = jax.random.split(key)
    x = jax.random.normal(k_x, (B, C, H, W), jnp.float32)

    fwd = jax.jit(dqn_forward, static_argnames=("num_actions", "duel_net"))

    # --- standard DQN head ---
    params = init_dqn_params(k_p, C, NUM_ACTIONS, duel_net=False)
    packed = pack_params(params, NUM_ACTIONS, duel_net=False)
    q = jax.block_until_ready(fwd(packed, x, num_actions=NUM_ACTIONS,
                                  duel_net=False))
    q_ref = dqn_reference(params, x, duel_net=False)
    assert q.shape == (B, NUM_ACTIONS)
    assert jnp.allclose(q, q_ref, rtol=5e-2, atol=5e-2), (
        f"max abs err {float(jnp.max(jnp.abs(q - q_ref)))}")

    # --- dueling head ---
    params_d = init_dqn_params(k_p, C, NUM_ACTIONS, duel_net=True)
    packed_d = pack_params(params_d, NUM_ACTIONS, duel_net=True)
    qd = jax.block_until_ready(fwd(packed_d, x, num_actions=NUM_ACTIONS,
                                   duel_net=True))
    qd_ref = dqn_reference(params_d, x, duel_net=True)
    assert qd.shape == (B, NUM_ACTIONS)
    assert jnp.allclose(qd, qd_ref, rtol=5e-2, atol=5e-2), (
        f"max abs err {float(jnp.max(jnp.abs(qd - qd_ref)))}")

    print("KERNEL_OK")
</pallas_src>

<mosaic_0001>
module attributes {stable_mosaic.version = 11 : i64} {
  func.func @_mm_bias_act_kernel(%arg0: i32, %arg1: memref<400x256xbf16, #tpu.memory_space<vmem>>, %arg2: memref<256x32xbf16, #tpu.memory_space<vmem>>, %arg3: memref<1x32xf32, #tpu.memory_space<vmem>>, %arg4: memref<400x32xbf16, #tpu.memory_space<vmem>>) attributes {dimension_semantics = [#tpu.dimension_semantics<parallel>], iteration_bounds = array<i64: 2>, scalar_prefetch = 0 : i64, scratch_operands = 0 : i64, tpu.core_type = #tpu.core_type<tc>, window_params = [{transform_indices = @transform_0, window_bounds = array<i64: 400, 256>}, {pipeline_mode = #tpu.pipeline_mode<synchronous>, transform_indices = @transform_1, window_bounds = array<i64: 256, 32>}, {pipeline_mode = #tpu.pipeline_mode<synchronous>, transform_indices = @transform_2, window_bounds = array<i64: 1, 32>}, {transform_indices = @transform_3, window_bounds = array<i64: 400, 32>}]} {
    %c0 = arith.constant 0 : index
    %c0_0 = arith.constant 0 : index
    %0 = vector.load %arg1[%c0, %c0_0] : memref<400x256xbf16, #tpu.memory_space<vmem>>, vector<400x256xbf16>
    %c0_1 = arith.constant 0 : index
    %c0_2 = arith.constant 0 : index
    %1 = vector.load %arg2[%c0_1, %c0_2] : memref<256x32xbf16, #tpu.memory_space<vmem>>, vector<256x32xbf16>
    %cst = arith.constant dense<0.000000e+00> : vector<400x32xf32>
    %2 = tpu.matmul %0, %1, %cst {dimension_numbers = #tpu.dot_dimension_numbers<[1], [0], [0], [1], [0, 0, 1, 1], [], []>} : vector<400x256xbf16>, vector<256x32xbf16>, vector<400x32xf32> -> vector<400x32xf32>
    %c0_3 = arith.constant 0 : index
    %c0_4 = arith.constant 0 : index
    %3 = vector.load %arg3[%c0_3, %c0_4] : memref<1x32xf32, #tpu.memory_space<vmem>>, vector<1x32xf32>
    %4 = vector.broadcast %3 : vector<1x32xf32> to vector<400x32xf32>
    %5 = arith.addf %2, %4 : vector<400x32xf32>
    %cst_5 = arith.constant 0.000000e+00 : f32
    %6 = vector.broadcast %cst_5 : f32 to vector<400x32xf32>
    %7 = arith.maximumf %5, %6 : vector<400x32xf32>
    %8 = arith.truncf %7 : vector<400x32xf32> to vector<400x32xbf16>
    %c0_6 = arith.constant 0 : index
    %c0_7 = arith.constant 0 : index
    %9 = vector.load %arg4[%c0_6, %c0_7] : memref<400x32xbf16, #tpu.memory_space<vmem>>, vector<400x32xbf16>
    tpu.vector_store %arg4[%c0_6, %c0_7], %8 {strides = array<i32>} : memref<400x32xbf16, #tpu.memory_space<vmem>>, vector<400x32xbf16>,
    return
  }
  func.func @transform_0(%arg0: i32) -> (i32, i32) {
    %c0_i32 = arith.constant 0 : i32
    %c0_i32_0 = arith.constant 0 : i32
    return %arg0, %c0_i32 : i32, i32
  }
  func.func @transform_1(%arg0: i32) -> (i32, i32) {
    %c0_i32 = arith.constant 0 : i32
    %c0_i32_0 = arith.constant 0 : i32
    %c0_i32_1 = arith.constant 0 : i32
    return %c0_i32, %c0_i32_0 : i32, i32
  }
  func.func @transform_2(%arg0: i32) -> (i32, i32) {
    %c0_i32 = arith.constant 0 : i32
    %c0_i32_0 = arith.constant 0 : i32
    %c0_i32_1 = arith.constant 0 : i32
    return %c0_i32, %c0_i32_0 : i32, i32
  }
  func.func @transform_3(%arg0: i32) -> (i32, i32) {
    %c0_i32 = arith.constant 0 : i32
    %c0_i32_0 = arith.constant 0 : i32
    return %arg0, %c0_i32 : i32, i32
  }
}

module attributes {stable_mosaic.version = 11 : i64} {
  func.func @_mm_bias_act_kernel(%arg0: i32, %arg1: memref<162x512xbf16, #tpu.memory_space<vmem>>, %arg2: memref<512x64xbf16, #tpu.memory_space<vmem>>, %arg3: memref<1x64xf32, #tpu.memory_space<vmem>>, %arg4: memref<162x64xbf16, #tpu.memory_space<vmem>>) attributes {dimension_semantics = [#tpu.dimension_semantics<parallel>], iteration_bounds = array<i64: 1>, scalar_prefetch = 0 : i64, scratch_operands = 0 : i64, tpu.core_type = #tpu.core_type<tc>, window_params = [{transform_indices = @transform_0, window_bounds = array<i64: 162, 512>}, {pipeline_mode = #tpu.pipeline_mode<synchronous>, transform_indices = @transform_1, window_bounds = array<i64: 512, 64>}, {pipeline_mode = #tpu.pipeline_mode<synchronous>, transform_indices = @transform_2, window_bounds = array<i64: 1, 64>}, {transform_indices = @transform_3, window_bounds = array<i64: 162, 64>}]} {
    %c0 = arith.constant 0 : index
    %c0_0 = arith.constant 0 : index
    %0 = vector.load %arg1[%c0, %c0_0] : memref<162x512xbf16, #tpu.memory_space<vmem>>, vector<162x512xbf16>
    %c0_1 = arith.constant 0 : index
    %c0_2 = arith.constant 0 : index
    %1 = vector.load %arg2[%c0_1, %c0_2] : memref<512x64xbf16, #tpu.memory_space<vmem>>, vector<512x64xbf16>
    %cst = arith.constant dense<0.000000e+00> : vector<162x64xf32>
    %2 = tpu.matmul %0, %1, %cst {dimension_numbers = #tpu.dot_dimension_numbers<[1], [0], [0], [1], [0, 0, 1, 1], [], []>} : vector<162x512xbf16>, vector<512x64xbf16>, vector<162x64xf32> -> vector<162x64xf32>
    %c0_3 = arith.constant 0 : index
    %c0_4 = arith.constant 0 : index
    %3 = vector.load %arg3[%c0_3, %c0_4] : memref<1x64xf32, #tpu.memory_space<vmem>>, vector<1x64xf32>
    %4 = vector.broadcast %3 : vector<1x64xf32> to vector<162x64xf32>
    %5 = arith.addf %2, %4 : vector<162x64xf32>
    %cst_5 = arith.constant 0.000000e+00 : f32
    %6 = vector.broadcast %cst_5 : f32 to vector<162x64xf32>
    %7 = arith.maximumf %5, %6 : vector<162x64xf32>
    %8 = arith.truncf %7 : vector<162x64xf32> to vector<162x64xbf16>
    %c0_6 = arith.constant 0 : index
    %c0_7 = arith.constant 0 : index
    %9 = vector.load %arg4[%c0_6, %c0_7] : memref<162x64xbf16, #tpu.memory_space<vmem>>, vector<162x64xbf16>
    tpu.vector_store %arg4[%c0_6, %c0_7], %8 {strides = array<i32>} : memref<162x64xbf16, #tpu.memory_space<vmem>>, vector<162x64xbf16>,
    return
  }
  func.func @transform_0(%arg0: i32) -> (i32, i32) {
    %c0_i32 = arith.constant 0 : i32
    %c0_i32_0 = arith.constant 0 : i32
    return %arg0, %c0_i32 : i32, i32
  }
  func.func @transform_1(%arg0: i32) -> (i32, i32) {
    %c0_i32 = arith.constant 0 : i32
    %c0_i32_0 = arith.constant 0 : i32
    %c0_i32_1 = arith.constant 0 : i32
    return %c0_i32, %c0_i32_0 : i32, i32
  }
  func.func @transform_2(%arg0: i32) -> (i32, i32) {
    %c0_i32 = arith.constant 0 : i32
    %c0_i32_0 = arith.constant 0 : i32
    %c0_i32_1 = arith.constant 0 : i32
    return %c0_i32, %c0_i32_0 : i32, i32
  }
  func.func @transform_3(%arg0: i32) -> (i32, i32) {
    %c0_i32 = arith.constant 0 : i32
    %c0_i32_0 = arith.constant 0 : i32
    return %arg0, %c0_i32 : i32, i32
  }
}

module attributes {stable_mosaic.version = 11 : i64} {
  func.func @_conv3_fc_head_kernel(%arg0: i32, %arg1: memref<49x2x576xbf16, #tpu.memory_space<vmem>>, %arg2: memref<576x64xbf16, #tpu.memory_space<vmem>>, %arg3: memref<1x64xf32, #tpu.memory_space<vmem>>, %arg4: memref<49x64x512xbf16, #tpu.memory_space<vmem>>, %arg5: memref<1x512xf32, #tpu.memory_space<vmem>>, %arg6: memref<512x128xbf16, #tpu.memory_space<vmem>>, %arg7: memref<1x128xf32, #tpu.memory_space<vmem>>, %arg8: memref<2x128xf32, #tpu.memory_space<vmem>>) attributes {dimension_semantics = [#tpu.dimension_semantics<parallel>], iteration_bounds = array<i64: 1>, scalar_prefetch = 0 : i64, scratch_operands = 0 : i64, tpu.core_type = #tpu.core_type<tc>, window_params = [{transform_indices = @transform_0, window_bounds = array<i64: 49, 2, 576>}, {pipeline_mode = #tpu.pipeline_mode<synchronous>, transform_indices = @transform_1, window_bounds = array<i64: 576, 64>}, {pipeline_mode = #tpu.pipeline_mode<synchronous>, transform_indices = @transform_2, window_bounds = array<i64: 1, 64>}, {pipeline_mode = #tpu.pipeline_mode<synchronous>, transform_indices = @transform_3, window_bounds = array<i64: 49, 64, 512>}, {pipeline_mode = #tpu.pipeline_mode<synchronous>, transform_indices = @transform_4, window_bounds = array<i64: 1, 512>}, {pipeline_mode = #tpu.pipeline_mode<synchronous>, transform_indices = @transform_5, window_bounds = array<i64: 512, 128>}, {pipeline_mode = #tpu.pipeline_mode<synchronous>, transform_indices = @transform_6, window_bounds = array<i64: 1, 128>}, {transform_indices = @transform_7, window_bounds = array<i64: 2, 128>}]} {
    %cst = arith.constant 0.000000e+00 : f32
    %0 = vector.broadcast %cst : f32 to vector<2x512xf32>
    %c0_i32 = arith.constant 0 : i32
    %c49_i32 = arith.constant 49 : i32
    %1 = arith.addi %c0_i32, %c49_i32 : i32
    %c1_i32 = arith.constant 1 : i32
    %2 = scf.for %arg9 = %c0_i32 to %1 step %c1_i32 iter_args(%arg10 = %0) -> (vector<2x512xf32>)  : i32 {
      %18 = arith.index_cast %arg9 : i32 to index
      %c0_11 = arith.constant 0 : index
      %c0_12 = arith.constant 0 : index
      %19 = vector.load %arg1[%18, %c0_11, %c0_12] : memref<49x2x576xbf16, #tpu.memory_space<vmem>>, vector<1x2x576xbf16>
      %20 = vector.shape_cast %19 : vector<1x2x576xbf16> to vector<2x576xbf16>
      %c0_13 = arith.constant 0 : index
      %c0_14 = arith.constant 0 : index
      %21 = vector.load %arg2[%c0_13, %c0_14] : memref<576x64xbf16, #tpu.memory_space<vmem>>, vector<576x64xbf16>
      %cst_15 = arith.constant dense<0.000000e+00> : vector<2x64xf32>
      %22 = tpu.matmul %20, %21, %cst_15 {dimension_numbers = #tpu.dot_dimension_numbers<[1], [0], [0], [1], [0, 0, 1, 1], [], []>} : vector<2x576xbf16>, vector<576x64xbf16>, vector<2x64xf32> -> vector<2x64xf32>
      %c0_16 = arith.constant 0 : index
      %c0_17 = arith.constant 0 : index
      %23 = vector.load %arg3[%c0_16, %c0_17] : memref<1x64xf32, #tpu.memory_space<vmem>>, vector<1x64xf32>
      %24 = vector.broadcast %23 : vector<1x64xf32> to vector<2x64xf32>
      %25 = arith.addf %22, %24 : vector<2x64xf32>
      %cst_18 = arith.constant 0.000000e+00 : f32
      %26 = vector.broadcast %cst_18 : f32 to vector<2x64xf32>
      %27 = arith.maximumf %25, %26 : vector<2x64xf32>
      %28 = arith.truncf %27 : vector<2x64xf32> to vector<2x64xbf16>
      %29 = arith.index_cast %arg9 : i32 to index
      %c0_19 = arith.constant 0 : index
      %c0_20 = arith.constant 0 : index
      %30 = vector.load %arg4[%29, %c0_19, %c0_20] : memref<49x64x512xbf16, #tpu.memory_space<vmem>>, vector<1x64x512xbf16>
      %31 = vector.shape_cast %30 : vector<1x64x512xbf16> to vector<64x512xbf16>
      %cst_21 = arith.constant dense<0.000000e+00> : vector<2x512xf32>
      %32 = tpu.matmul %28, %31, %cst_21 {dimension_numbers = #tpu.dot_dimension_numbers<[1], [0], [0], [1], [0, 0, 1, 1], [], []>} : vector<2x64xbf16>, vector<64x512xbf16>, vector<2x512xf32> -> vector<2x512xf32>
      %33 = arith.addf %arg10, %32 : vector<2x512xf32>
      scf.yield %33 : vector<2x512xf32>
    }
    %c49_i32_0 = arith.constant 49 : i32
    %c0 = arith.constant 0 : index
    %c0_1 = arith.constant 0 : index
    %3 = vector.load %arg5[%c0, %c0_1] : memref<1x512xf32, #tpu.memory_space<vmem>>, vector<1x512xf32>
    %4 = vector.broadcast %3 : vector<1x512xf32> to vector<2x512xf32>
    %5 = arith.addf %2, %4 : vector<2x512xf32>
    %cst_2 = arith.constant 0.000000e+00 : f32
    %6 = vector.broadcast %cst_2 : f32 to vector<2x512xf32>
    %7 = arith.cmpf ogt, %5, %6 : vector<2x512xf32>
    %cst_3 = arith.constant 0.00999999977 : f32
    %8 = vector.broadcast %cst_3 : f32 to vector<2x512xf32>
    %9 = arith.mulf %8, %5 : vector<2x512xf32>
    %10 = arith.select %7, %5, %9 : vector<2x512xi1>, vector<2x512xf32>
    %11 = arith.truncf %10 : vector<2x512xf32> to vector<2x512xbf16>
    %c0_4 = arith.constant 0 : index
    %c0_5 = arith.constant 0 : index
    %12 = vector.load %arg6[%c0_4, %c0_5] : memref<512x128xbf16, #tpu.memory_space<vmem>>, vector<512x128xbf16>
    %cst_6 = arith.constant dense<0.000000e+00> : vector<2x128xf32>
    %13 = tpu.matmul %11, %12, %cst_6 {dimension_numbers = #tpu.dot_dimension_numbers<[1], [0], [0], [1], [0, 0, 1, 1], [], []>} : vector<2x512xbf16>, vector<512x128xbf16>, vector<2x128xf32> -> vector<2x128xf32>
    %c0_7 = arith.constant 0 : index
    %c0_8 = arith.constant 0 : index
    %14 = vector.load %arg7[%c0_7, %c0_8] : memref<1x128xf32, #tpu.memory_space<vmem>>, vector<1x128xf32>
    %15 = vector.broadcast %14 : vector<1x128xf32> to vector<2x128xf32>
    %16 = arith.addf %13, %15 : vector<2x128xf32>
    %c0_9 = arith.constant 0 : index
    %c0_10 = arith.constant 0 : index
    %17 = vector.load %arg8[%c0_9, %c0_10] : memref<2x128xf32, #tpu.memory_space<vmem>>, vector<2x128xf32>
    tpu.vector_store %arg8[%c0_9, %c0_10], %16 {strides = array<i32>} : memref<2x128xf32, #tpu.memory_space<vmem>>, vector<2x128xf32>,
    return
  }
  func.func @transform_0(%arg0: i32) -> (i32, i32, i32) {
    %c0_i32 = arith.constant 0 : i32
    %c0_i32_0 = arith.constant 0 : i32
    %c0_i32_1 = arith.constant 0 : i32
    return %c0_i32, %arg0, %c0_i32_0 : i32, i32, i32
  }
  func.func @transform_1(%arg0: i32) -> (i32, i32) {
    %c0_i32 = arith.constant 0 : i32
    %c0_i32_0 = arith.constant 0 : i32
    %c0_i32_1 = arith.constant 0 : i32
    return %c0_i32, %c0_i32_0 : i32, i32
  }
  func.func @transform_2(%arg0: i32) -> (i32, i32) {
    %c0_i32 = arith.constant 0 : i32
    %c0_i32_0 = arith.constant 0 : i32
    %c0_i32_1 = arith.constant 0 : i32
    return %c0_i32, %c0_i32_0 : i32, i32
  }
  func.func @transform_3(%arg0: i32) -> (i32, i32, i32) {
    %c0_i32 = arith.constant 0 : i32
    %c0_i32_0 = arith.constant 0 : i32
    %c0_i32_1 = arith.constant 0 : i32
    %c0_i32_2 = arith.constant 0 : i32
    return %c0_i32, %c0_i32_0, %c0_i32_1 : i32, i32, i32
  }
  func.func @transform_4(%arg0: i32) -> (i32, i32) {
    %c0_i32 = arith.constant 0 : i32
    %c0_i32_0 = arith.constant 0 : i32
    %c0_i32_1 = arith.constant 0 : i32
    return %c0_i32, %c0_i32_0 : i32, i32
  }
  func.func @transform_5(%arg0: i32) -> (i32, i32) {
    %c0_i32 = arith.constant 0 : i32
    %c0_i32_0 = arith.constant 0 : i32
    %c0_i32_1 = arith.constant 0 : i32
    return %c0_i32, %c0_i32_0 : i32, i32
  }
  func.func @transform_6(%arg0: i32) -> (i32, i32) {
    %c0_i32 = arith.constant 0 : i32
    %c0_i32_0 = arith.constant 0 : i32
    %c0_i32_1 = arith.constant 0 : i32
    return %c0_i32, %c0_i32_0 : i32, i32
  }
  func.func @transform_7(%arg0: i32) -> (i32, i32) {
    %c0_i32 = arith.constant 0 : i32
    %c0_i32_0 = arith.constant 0 : i32
    return %arg0, %c0_i32 : i32, i32
  }
}

</mosaic_0001>

<llo_original>
// kernel: dqn_forward.3
$region0: #{dqn_forward.3}
  #allocation0 [shape = 'u32[]', space=smem, size = 0x4, offset = 0x4, fixed_abs, tag = 'smem constant byte address 0x4 - core index']
  #allocation1 [shape = 'u32[72,128]{1,0:T(1,128)}', space=vmem, size = 0x9000, scoped, tag = 'internal scratch']
  %s0 = inlined_call_operand.vmem [shape: bf16[800,256], index: 0, kind: input, shape index: {}]
  %s1 = inlined_call_operand.vmem [shape: bf16[256,32], index: 1, kind: input, shape index: {}]
  %s2 = inlined_call_operand.vmem [shape: f32[1,32], index: 2, kind: input, shape index: {}]
  %s3 = inlined_call_operand.vmem [shape: bf16[800,32], index: 3, kind: output, shape index: {}]
  %s4 = sld [smem:[#allocation0]]
  $region45: #{dqn_forward.3} parent=0
    _
  %s6 = ssub.s32 1, %s4
  %s7 = scalar_select 0, %s6, %s4
  loop: start=0, step=1, limit=4
  $region2: #{dqn_forward.3} parent=0 // loop_pre_header
    _
  $region3: #{dqn_forward.3} parent=0 // loop_header
    %s9 = sphi 0, %s13
    %p10 = scmp.ge.s32.totalorder %s9, 4
    %s19 = sphi 0, %s21
    %s22 = sphi 0, %s19
    %s23 = sphi 0, %s22
    %s39 = sphi 0, %s23
    %s43 = sphi 0, %s43
    %s45 = sphi 0, %s43
    %s46 = sphi 0, %s45
    %s60 = sphi 0, %s46
    %s64 = sphi 0, %s64
    %s66 = sphi 0, %s64
    %s67 = sphi 0, %s66
    %s81 = sphi 0, %s67
    %s87 = sphi 0, %s89
    %s90 = sphi 0, %s87
    %s91 = sphi 0, %s90
    %s107 = sphi 0, %s91
  $region4: #{dqn_forward.3} parent=0 // loop_header_branch
    %12 = sbr.rel (%p10) target = $region8
  $region5: #{dqn_forward.3} parent=0 // loop_body
    %s14 = ssub.s32 %s9, 1
    %s15 = ssub.s32 %s9, 2
    %s16 = sadd.s32 %s9, 1
    %s17 = ssub.s32 %s9, %s16
    %p18 = scmp.eq.s32.totalorder %s17, 0
    %s20 = sadd.s32 %s19, 1
    %s21 = scalar_select %p18, %s19, %s20
    %p24 = pneg %p18
    %p25 = scmp.eq.s32.totalorder %s9, 1
    %p26 = por %p24, %p25
    %p27 = scmp.ne.s32.totalorder %s19, %s22
    %p28 = scmp.eq.s32.totalorder %s9, 0
    %p29 = por %p27, %p28
    %p30 = scmp.ne.s32.totalorder %s19, %s22
    %p31 = scmp.eq.s32.totalorder %s14, 1
    %p32 = por %p30, %p31
    %p33 = scmp.ne.s32.totalorder %s22, %s23
    %p34 = scmp.eq.s32.totalorder %s14, 0
    %p35 = por %p33, %p34
    %p36 = scmp.ne.s32.totalorder %s22, %s23
    %p37 = scmp.eq.s32.totalorder %s15, 1
    %p38 = por %p36, %p37
    %p40 = scmp.ne.s32.totalorder %s23, %s39
    %p41 = scmp.eq.s32.totalorder %s15, 0
    %p42 = por %p40, %p41
    %s44 = sadd.s32 %s43, 1
    %p47 = scmp.eq.s32.totalorder %s9, 1
    %p48 = scmp.ne.s32.totalorder %s43, %s45
    %p49 = scmp.eq.s32.totalorder %s9, 0
    %p50 = por %p48, %p49
    %p51 = scmp.ne.s32.totalorder %s43, %s45
    %p52 = scmp.eq.s32.totalorder %s14, 1
    %p53 = por %p51, %p52
    %p54 = scmp.ne.s32.totalorder %s45, %s46
    %p55 = scmp.eq.s32.totalorder %s14, 0
    %p56 = por %p54, %p55
    %p57 = scmp.ne.s32.totalorder %s45, %s46
    %p58 = scmp.eq.s32.totalorder %s15, 1
    %p59 = por %p57, %p58
    %p61 = scmp.ne.s32.totalorder %s46, %s60
    %p62 = scmp.eq.s32.totalorder %s15, 0
    %p63 = por %p61, %p62
    %s65 = sadd.s32 %s64, 1
    %p68 = scmp.eq.s32.totalorder %s9, 1
    %p69 = scmp.ne.s32.totalorder %s64, %s66
    %p70 = scmp.eq.s32.totalorder %s9, 0
    %p71 = por %p69, %p70
    %p72 = scmp.ne.s32.totalorder %s64, %s66
    %p73 = scmp.eq.s32.totalorder %s14, 1
    %p74 = por %p72, %p73
    %p75 = scmp.ne.s32.totalorder %s66, %s67
    %p76 = scmp.eq.s32.totalorder %s14, 0
    %p77 = por %p75, %p76
    %p78 = scmp.ne.s32.totalorder %s66, %s67
    %p79 = scmp.eq.s32.totalorder %s15, 1
    %p80 = por %p78, %p79
    %p82 = scmp.ne.s32.totalorder %s67, %s81
    %p83 = scmp.eq.s32.totalorder %s15, 0
    %p84 = por %p82, %p83
    %s85 = ssub.s32 %s9, %s16
    %p86 = scmp.eq.s32.totalorder %s85, 0
    %s88 = sadd.s32 %s87, 1
    %s89 = scalar_select %p86, %s87, %s88
    %p92 = pneg %p86
    %p93 = scmp.eq.s32.totalorder %s9, 1
    %p94 = por %p92, %p93
    %p95 = scmp.ne.s32.totalorder %s87, %s90
    %p96 = scmp.eq.s32.totalorder %s9, 0
    %p97 = por %p95, %p96
    %p98 = scmp.ne.s32.totalorder %s87, %s90
    %p99 = scmp.eq.s32.totalorder %s14, 1
    %p100 = por %p98, %p99
    %p101 = scmp.ne.s32.totalorder %s90, %s91
    %p102 = scmp.eq.s32.totalorder %s14, 0
    %p103 = por %p101, %p102
    %p104 = scmp.ne.s32.totalorder %s90, %s91
    %p105 = scmp.eq.s32.totalorder %s15, 1
    %p106 = por %p104, %p105
    %p108 = scmp.ne.s32.totalorder %s91, %s107
    %p109 = scmp.eq.s32.totalorder %s15, 0
    %p110 = por %p108, %p109
    %p111 = scmp.le.s32.totalorder 1, %s9
    %p112 = scmp.lt.s32.totalorder %s9, 3
    %p113 = pnand %p111, %p112
    %p114 = pneg %p113
    // Predicated region
    $region9: #{dqn_forward.3} parent=5 // pred_check
      _
    $region10: #{dqn_forward.3} parent=5 // pred_check_branch
      %116 = sbr.rel (%p113) target = $region12
    $region11: #{dqn_forward.3} parent=5 // pred_region
      %s117 = ssub.s32 %s9, 1
      // Predicated region
      $region13: #{dqn_forward.3} parent=11 // pred_check
        %p118 = pneg %p56
      $region14: #{dqn_forward.3} parent=11 // pred_check_branch
        %120 = sbr.rel (%p118) target = $region16
      $region15: #{dqn_forward.3} parent=11 // pred_region
        _
      $region16: #{dqn_forward.3} parent=11 // pred_fallthru
        _
      // Predicated region
      $region17: #{dqn_forward.3} parent=11 // pred_check
        %p121 = pneg %p77
      $region18: #{dqn_forward.3} parent=11 // pred_check_branch
        %123 = sbr.rel (%p121) target = $region20
      $region19: #{dqn_forward.3} parent=11 // pred_region
        _
      $region20: #{dqn_forward.3} parent=11 // pred_fallthru
        _
    $region12: #{dqn_forward.3} parent=5 // pred_fallthru
      _
    %p124 = scmp.lt.s32.totalorder %s9, 2
    // Predicated region
    $region21: #{dqn_forward.3} parent=5 // pred_check
      %p125 = pneg %p124
    $region22: #{dqn_forward.3} parent=5 // pred_check_branch
      %127 = sbr.rel (%p125) target = $region24
    $region23: #{dqn_forward.3} parent=5 // pred_region
      // Predicated region
      $region25: #{dqn_forward.3} parent=23 // pred_check
        %p128 = pneg %p29
      $region26: #{dqn_forward.3} parent=23 // pred_check_branch
        %130 = sbr.rel (%p128) target = $region28
      $region27: #{dqn_forward.3} parent=23 // pred_region
        %s131 = smul.u32 50, %s9
        %p132 = scmp.lt.s32.totalorder %s131, 99
        %s133 = scalar_select %p132, %s131, 99
        %s134 = smul.addr %s133, 2
        %s135 = smul.addr %s134, 4
        %s136 = scalar_lea.vmem %s0, %s135
        %s137 = smul.u32 50, %s9
      $region28: #{dqn_forward.3} parent=23 // pred_fallthru
        _
    $region24: #{dqn_forward.3} parent=5 // pred_fallthru
      _
    %p138 = scmp.le.s32.totalorder 1, %s9
    %p139 = scmp.lt.s32.totalorder %s9, 3
    %p140 = pnand %p138, %p139
    %p141 = pneg %p140
    // Predicated region
    $region29: #{dqn_forward.3} parent=5 // pred_check
      _
    $region30: #{dqn_forward.3} parent=5 // pred_check_branch
      %143 = sbr.rel (%p140) target = $region32
    $region31: #{dqn_forward.3} parent=5 // pred_region
      %s144 = ssub.s32 %s9, 1
      %s145 = smul.u32 50, %s14
      %p146 = scmp.lt.s32.totalorder %s145, 99
      %s147 = scalar_select %p146, %s145, 99
      %s148 = smul.addr %s147, 2
      %s149 = smul.addr %s148, 4
      %s150 = scalar_lea.vmem %s0, %s149
      %p151 = pneg %p35
      %p152 = pneg %p32
      %p153 = pneg %p56
      %p154 = pneg %p53
      %p155 = pneg %p77
      %p156 = pneg %p74
      %p157 = pneg %p103
      %p158 = pneg %p100
      %s159 = smul.u32 50, %s14
      %p160 = scmp.lt.s32.totalorder %s159, 99
      %s161 = scalar_select %p160, %s159, 99
      %s162 = smul.addr %s161, 4
      %s163 = scalar_lea.vmem %s3, %s162
      %s164 = smul.u32 50, %s14
      %p165 = scmp.lt.s32.totalorder %s164, 99
      %s166 = scalar_select %p165, %s164, 99
      %s167 = smul.addr %s166, 2
      %s168 = smul.addr %s167, 4
      %s169 = scalar_lea.vmem %s0, %s168
      %s170 = smul.u32 50, %s14
      %s171 = smul.u32 50, %s14
      %p172 = scmp.lt.s32.totalorder %s171, 99
      %s173 = scalar_select %p172, %s171, 99
      %s174 = smul.addr %s173, 4
      %s175 = scalar_lea.vmem %s3, %s174
      %s176 = smul.u32 50, %s14
      %v177 = vld [vmem:[%s169] sm:$0xff]
      %v178 = vld [vmem:[%s169 + $0x8] sm:$0xff]
      %v179 = vld [vmem:[%s169 + $0x10] sm:$0xff]
      %v180 = vld [vmem:[%s169 + $0x18] sm:$0xff]
      %v181 = vld [vmem:[%s169 + $0x20] sm:$0xff]
      %v182 = vld [vmem:[%s169 + $0x28] sm:$0xff]
      %v183 = vld [vmem:[%s169 + $0x30] sm:$0xff]
      %v184 = vld [vmem:[%s169 + $0x38] sm:$0xff]
      %v185 = vld [vmem:[%s169 + $0x40] sm:$0xff]
      %v186 = vld [vmem:[%s169 + $0x48] sm:$0xff]
      %v187 = vld [vmem:[%s169 + $0x50] sm:$0xff]
      %v188 = vld [vmem:[%s169 + $0x58] sm:$0xff]
      %v189 = vld [vmem:[%s169 + $0x60] sm:$0xff]
      %v190 = vld [vmem:[%s169 + $0x68] sm:$0xff]
      %v191 = vld [vmem:[%s169 + $0x70] sm:$0xff]
      %v192 = vld [vmem:[%s169 + $0x78] sm:$0xff]
      %v193 = vld [vmem:[%s169 + $0x80] sm:$0xff]
      %v194 = vld [vmem:[%s169 + $0x88] sm:$0xff]
      %v195 = vld [vmem:[%s169 + $0x90] sm:$0xff]
      %v196 = vld [vmem:[%s169 + $0x98] sm:$0xff]
      %v197 = vld [vmem:[%s169 + $0xa0] sm:$0xff]
      %v198 = vld [vmem:[%s169 + $0xa8] sm:$0xff]
      %v199 = vld [vmem:[%s169 + $0xb0] sm:$0xff]
      %v200 = vld [vmem:[%s169 + $0xb8] sm:$0xff]
      %v201 = vld [vmem:[%s169 + $0xc0] sm:$0xff]
      %v202 = vld [vmem:[%s169 + $0xc8] sm:$0xff]
      %v203 = vld [vmem:[%s169 + $0xd0] sm:$0xff]
      %v204 = vld [vmem:[%s169 + $0xd8] sm:$0xff]
      %v205 = vld [vmem:[%s169 + $0xe0] sm:$0xff]
      %v206 = vld [vmem:[%s169 + $0xe8] sm:$0xff]
      %v207 = vld [vmem:[%s169 + $0xf0] sm:$0xff]
      %v208 = vld [vmem:[%s169 + $0xf8] sm:$0xff]
      %v209 = vld [vmem:[%s169 + $0x100] sm:$0xff]
      %v210 = vld [vmem:[%s169 + $0x108] sm:$0xff]
      %v211 = vld [vmem:[%s169 + $0x110] sm:$0xff]
      %v212 = vld [vmem:[%s169 + $0x118] sm:$0xff]
      %v213 = vld [vmem:[%s169 + $0x120] sm:$0xff]
      %v214 = vld [vmem:[%s169 + $0x128] sm:$0xff]
      %v215 = vld [vmem:[%s169 + $0x130] sm:$0xff]
      %v216 = vld [vmem:[%s169 + $0x138] sm:$0xff]
      %v217 = vld [vmem:[%s169 + $0x140] sm:$0xff]
      %v218 = vld [vmem:[%s169 + $0x148] sm:$0xff]
      %v219 = vld [vmem:[%s169 + $0x150] sm:$0xff]
      %v220 = vld [vmem:[%s169 + $0x158] sm:$0xff]
      %v221 = vld [vmem:[%s169 + $0x160] sm:$0xff]
      %v222 = vld [vmem:[%s169 + $0x168] sm:$0xff]
      %v223 = vld [vmem:[%s169 + $0x170] sm:$0xff]
      %v224 = vld [vmem:[%s169 + $0x178] sm:$0xff]
      %v225 = vld [vmem:[%s169 + $0x180] sm:$0xff]
      %v226 = vld [vmem:[%s169 + $0x188] sm:$0xff]
      %v227 = vld [vmem:[%s1] sm:$0xf]
      %v228 = vld [vmem:[%s1 + $0x4] sm:$0xf]
      %v229 = vld [vmem:[%s1 + $0x8] sm:$0xf]
      %v230 = vld [vmem:[%s1 + $0xc] sm:$0xf]
      %v231 = vld [vmem:[%s1 + $0x10] sm:$0xf]
      %v232 = vld [vmem:[%s1 + $0x14] sm:$0xf]
      %v233 = vld [vmem:[%s1 + $0x18] sm:$0xf]
      %v234 = vld [vmem:[%s1 + $0x1c] sm:$0xf]
      %v235 = vld [vmem:[%s1 + $0x20] sm:$0xf]
      %v236 = vld [vmem:[%s1 + $0x24] sm:$0xf]
      %v237 = vld [vmem:[%s1 + $0x28] sm:$0xf]
      %v238 = vld [vmem:[%s1 + $0x2c] sm:$0xf]
      %v239 = vld [vmem:[%s1 + $0x30] sm:$0xf]
      %v240 = vld [vmem:[%s1 + $0x34] sm:$0xf]
      %v241 = vld [vmem:[%s1 + $0x38] sm:$0xf]
      %v242 = vld [vmem:[%s1 + $0x3c] sm:$0xf]
      %v243 = vld [vmem:[%s1 + $0x40] sm:$0xf]
      %v244 = vld [vmem:[%s1 + $0x44] sm:$0xf]
      %v245 = vld [vmem:[%s1 + $0x48] sm:$0xf]
      %v246 = vld [vmem:[%s1 + $0x4c] sm:$0xf]
      %v247 = vld [vmem:[%s1 + $0x50] sm:$0xf]
      %v248 = vld [vmem:[%s1 + $0x54] sm:$0xf]
      %v249 = vld [vmem:[%s1 + $0x58] sm:$0xf]
      %v250 = vld [vmem:[%s1 + $0x5c] sm:$0xf]
      %v251 = vld [vmem:[%s1 + $0x60] sm:$0xf]
      %v252 = vld [vmem:[%s1 + $0x64] sm:$0xf]
      %v253 = vld [vmem:[%s1 + $0x68] sm:$0xf]
      %v254 = vld [vmem:[%s1 + $0x6c] sm:$0xf]
      %v255 = vld [vmem:[%s1 + $0x70] sm:$0xf]
      %v256 = vld [vmem:[%s1 + $0x74] sm:$0xf]
      %v257 = vld [vmem:[%s1 + $0x78] sm:$0xf]
      %v258 = vld [vmem:[%s1 + $0x7c] sm:$0xf]
      %v259 = vld [vmem:[%s2] sm:$0x1]
      %v261 = vperm.slane %v259, 0
      %v313 = vunpack.c.l.b16 %v177
      %v314 = vunpack.c.h.b16 %v177
      %v315 = vunpack.c.l.b16 %v178
      %v316 = vunpack.c.h.b16 %v178
      %v317 = vunpack.c.l.b16 %v179
      %v318 = vunpack.c.h.b16 %v179
      %v319 = vunpack.c.l.b16 %v180
      %v320 = vunpack.c.h.b16 %v180
      %v321 = vunpack.c.l.b16 %v181
      %v322 = vunpack.c.h.b16 %v181
      %v323 = vunpack.c.l.b16 %v182
      %v324 = vunpack.c.h.b16 %v182
      %v325 = vunpack.c.l.b16 %v183
      %v326 = vunpack.c.h.b16 %v183
      %v327 = vunpack.c.l.b16 %v184
      %v328 = vunpack.c.h.b16 %v184
      %v329 = vunpack.c.l.b16 %v185
      %v330 = vunpack.c.h.b16 %v185
      %v331 = vunpack.c.l.b16 %v186
      %v332 = vunpack.c.h.b16 %v186
      %v333 = vunpack.c.l.b16 %v187
      %v334 = vunpack.c.h.b16 %v187
      %v335 = vunpack.c.l.b16 %v188
      %v336 = vunpack.c.h.b16 %v188
      %v337 = vunpack.c.l.b16 %v189
      %v338 = vunpack.c.h.b16 %v189
      %v339 = vunpack.c.l.b16 %v190
      %v340 = vunpack.c.h.b16 %v190
      %v341 = vunpack.c.l.b16 %v191
      %v342 = vunpack.c.h.b16 %v191
      %v343 = vunpack.c.l.b16 %v192
      %v344 = vunpack.c.h.b16 %v192
      %v345 = vunpack.c.l.b16 %v193
      %v346 = vunpack.c.h.b16 %v193
      %v347 = vunpack.c.l.b16 %v194
      %v348 = vunpack.c.h.b16 %v194
      %v349 = vunpack.c.l.b16 %v195
      %v350 = vunpack.c.h.b16 %v195
      %v351 = vunpack.c.l.b16 %v196
      %v352 = vunpack.c.h.b16 %v196
      %v353 = vunpack.c.l.b16 %v197
      %v354 = vunpack.c.h.b16 %v197
      %v355 = vunpack.c.l.b16 %v198
      %v356 = vunpack.c.h.b16 %v198
      %v357 = vunpack.c.l.b16 %v199
      %v358 = vunpack.c.h.b16 %v199
      %v359 = vunpack.c.l.b16 %v200
      %v360 = vunpack.c.h.b16 %v200
      %v361 = vunpack.c.l.b16 %v201
      %v362 = vunpack.c.h.b16 %v201
      %v363 = vunpack.c.l.b16 %v202
      %v364 = vunpack.c.h.b16 %v202
      %v365 = vunpack.c.l.b16 %v203
      %v366 = vunpack.c.h.b16 %v203
      %v367 = vunpack.c.l.b16 %v204
      %v368 = vunpack.c.h.b16 %v204
      %v369 = vunpack.c.l.b16 %v205
      %v370 = vunpack.c.h.b16 %v205
      %v371 = vunpack.c.l.b16 %v206
      %v372 = vunpack.c.h.b16 %v206
      %v373 = vunpack.c.l.b16 %v207
      %v374 = vunpack.c.h.b16 %v207
      %v375 = vunpack.c.l.b16 %v208
      %v376 = vunpack.c.h.b16 %v208
      %v377 = vunpack.c.l.b16 %v209
      %v378 = vunpack.c.h.b16 %v209
      %v379 = vunpack.c.l.b16 %v210
      %v380 = vunpack.c.h.b16 %v210
      %v381 = vunpack.c.l.b16 %v211
      %v382 = vunpack.c.h.b16 %v211
      %v383 = vunpack.c.l.b16 %v212
      %v384 = vunpack.c.h.b16 %v212
      %v385 = vunpack.c.l.b16 %v213
      %v386 = vunpack.c.h.b16 %v213
      %v387 = vunpack.c.l.b16 %v214
      %v388 = vunpack.c.h.b16 %v214
      %v389 = vunpack.c.l.b16 %v215
      %v390 = vunpack.c.h.b16 %v215
      %v391 = vunpack.c.l.b16 %v216
      %v392 = vunpack.c.h.b16 %v216
      %v393 = vunpack.c.l.b16 %v217
      %v394 = vunpack.c.h.b16 %v217
      %v395 = vunpack.c.l.b16 %v218
      %v396 = vunpack.c.h.b16 %v218
      %v397 = vunpack.c.l.b16 %v219
      %v398 = vunpack.c.h.b16 %v219
      %v399 = vunpack.c.l.b16 %v220
      %v400 = vunpack.c.h.b16 %v220
      %v401 = vunpack.c.l.b16 %v221
      %v402 = vunpack.c.h.b16 %v221
      %v403 = vunpack.c.l.b16 %v222
      %v404 = vunpack.c.h.b16 %v222
      %v405 = vunpack.c.l.b16 %v223
      %v406 = vunpack.c.h.b16 %v223
      %v407 = vunpack.c.l.b16 %v224
      %v408 = vunpack.c.h.b16 %v224
      %v409 = vunpack.c.l.b16 %v225
      %v410 = vunpack.c.h.b16 %v225
      %v411 = vunpack.c.l.b16 %v226
      %v412 = vunpack.c.h.b16 %v226
      %v413 = vpack.c.b16 %v315, %v313
      %v414 = vpack.c.b16 %v316, %v314
      %v415 = vpack.c.b16 %v319, %v317
      %v416 = vpack.c.b16 %v320, %v318
      %v417 = vpack.c.b16 %v323, %v321
      %v418 = vpack.c.b16 %v324, %v322
      %v419 = vpack.c.b16 %v327, %v325
      %v420 = vpack.c.b16 %v328, %v326
      %v421 = vpack.c.b16 %v331, %v329
      %v422 = vpack.c.b16 %v332, %v330
      %v423 = vpack.c.b16 %v335, %v333
      %v424 = vpack.c.b16 %v336, %v334
      %v425 = vpack.c.b16 %v339, %v337
      %v426 = vpack.c.b16 %v340, %v338
      %v427 = vpack.c.b16 %v343, %v341
      %v428 = vpack.c.b16 %v344, %v342
      %v429 = vpack.c.b16 %v347, %v345
      %v430 = vpack.c.b16 %v348, %v346
      %v431 = vpack.c.b16 %v351, %v349
      %v432 = vpack.c.b16 %v352, %v350
      %v433 = vpack.c.b16 %v355, %v353
      %v434 = vpack.c.b16 %v356, %v354
      %v435 = vpack.c.b16 %v359, %v357
      %v436 = vpack.c.b16 %v360, %v358
      %v437 = vpack.c.b16 %v363, %v361
      %v438 = vpack.c.b16 %v364, %v362
      %v439 = vpack.c.b16 %v367, %v365
      %v440 = vpack.c.b16 %v368, %v366
      %v441 = vpack.c.b16 %v371, %v369
      %v442 = vpack.c.b16 %v372, %v370
      %v443 = vpack.c.b16 %v375, %v373
      %v444 = vpack.c.b16 %v376, %v374
      %v445 = vpack.c.b16 %v379, %v377
      %v446 = vpack.c.b16 %v380, %v378
      %v447 = vpack.c.b16 %v383, %v381
      %v448 = vpack.c.b16 %v384, %v382
      %v449 = vpack.c.b16 %v387, %v385
      %v450 = vpack.c.b16 %v388, %v386
      %v451 = vpack.c.b16 %v391, %v389
      %v452 = vpack.c.b16 %v392, %v390
      %v453 = vpack.c.b16 %v395, %v393
      %v454 = vpack.c.b16 %v396, %v394
      %v455 = vpack.c.b16 %v399, %v397
      %v456 = vpack.c.b16 %v400, %v398
      %v457 = vpack.c.b16 %v403, %v401
      %v458 = vpack.c.b16 %v404, %v402
      %v459 = vpack.c.b16 %v407, %v405
      %v460 = vpack.c.b16 %v408, %v406
      %v461 = vpack.c.b16 %v411, %v409
      %v462 = vpack.c.b16 %v412, %v410
      %v545 = vunpack.c.l.b16 %v227
      %v546 = vunpack.c.l.b16 %v228
      %v547 = vunpack.c.l.b16 %v229
      %v548 = vunpack.c.l.b16 %v230
      %v549 = vunpack.c.l.b16 %v231
      %v550 = vunpack.c.l.b16 %v232
      %v551 = vunpack.c.l.b16 %v233
      %v552 = vunpack.c.l.b16 %v234
      %v553 = vunpack.c.l.b16 %v235
      %v554 = vunpack.c.l.b16 %v236
      %v555 = vunpack.c.l.b16 %v237
      %v556 = vunpack.c.l.b16 %v238
      %v557 = vunpack.c.l.b16 %v239
      %v558 = vunpack.c.l.b16 %v240
      %v559 = vunpack.c.l.b16 %v241
      %v560 = vunpack.c.l.b16 %v242
      %v561 = vunpack.c.l.b16 %v243
      %v562 = vunpack.c.l.b16 %v244
      %v563 = vunpack.c.l.b16 %v245
      %v564 = vunpack.c.l.b16 %v246
      %v565 = vunpack.c.l.b16 %v247
      %v566 = vunpack.c.l.b16 %v248
      %v567 = vunpack.c.l.b16 %v249
      %v568 = vunpack.c.l.b16 %v250
      %v569 = vunpack.c.l.b16 %v251
      %v570 = vunpack.c.l.b16 %v252
      %v571 = vunpack.c.l.b16 %v253
      %v572 = vunpack.c.l.b16 %v254
      %v573 = vunpack.c.l.b16 %v255
      %v574 = vunpack.c.l.b16 %v256
      %v575 = vunpack.c.l.b16 %v257
      %v576 = vunpack.c.l.b16 %v258
      %v577 = vpack.c.b16 %v546, %v545
      %v578 = vpack.c.b16 %v548, %v547
      %v579 = vpack.c.b16 %v550, %v549
      %v580 = vpack.c.b16 %v552, %v551
      %v581 = vpack.c.b16 %v554, %v553
      %v582 = vpack.c.b16 %v556, %v555
      %v583 = vpack.c.b16 %v558, %v557
      %v584 = vpack.c.b16 %v560, %v559
      %v585 = vpack.c.b16 %v562, %v561
      %v586 = vpack.c.b16 %v564, %v563
      %v587 = vpack.c.b16 %v566, %v565
      %v588 = vpack.c.b16 %v568, %v567
      %v589 = vpack.c.b16 %v570, %v569
      %v590 = vpack.c.b16 %v572, %v571
      %v591 = vpack.c.b16 %v574, %v573
      %v592 = vpack.c.b16 %v576, %v575
      %609 = vmatpush.bf16.msra.mxu0 %v584
      %610 = vmatpush.bf16.msra.mxu0 %v583
      %611 = vmatpush.bf16.msra.mxu0 %v582
      %612 = vmatpush.bf16.msra.mxu0 %v581
      %613 = vmatpush.bf16.msra.mxu0 %v580
      %614 = vmatpush.bf16.msra.mxu0 %v579
      %615 = vmatpush.bf16.msra.mxu0 %v578
      %616 = vmatpush.bf16.msra.mxu0 %v577
      %617 = vmatmul.bf16.gmra.mxu0 %v413
      %v618 = vpop.f32.mrf.mxu0
      %v619 = vadd.f32 %v261, %v618
      %v620 = vpop.f32.mrf.mxu0
      %v621 = vadd.f32 %v261, %v620
      %622 = vmatmul.bf16.gmra.mxu0 %v415
      %v623 = vpop.f32.mrf.mxu0
      %v624 = vadd.f32 %v261, %v623
      %v625 = vpop.f32.mrf.mxu0
      %v626 = vadd.f32 %v261, %v625
      %627 = vmatmul.bf16.gmra.mxu0 %v417
      %v628 = vpop.f32.mrf.mxu0
      %v629 = vadd.f32 %v261, %v628
      %v630 = vpop.f32.mrf.mxu0
      %v631 = vadd.f32 %v261, %v630
      %632 = vmatmul.bf16.gmra.mxu0 %v419
      %v633 = vpop.f32.mrf.mxu0
      %v634 = vadd.f32 %v261, %v633
      %v635 = vpop.f32.mrf.mxu0
      %v636 = vadd.f32 %v261, %v635
      %637 = vmatmul.bf16.gmra.mxu0 %v421
      %v638 = vpop.f32.mrf.mxu0
      %v639 = vadd.f32 %v261, %v638
      %v640 = vpop.f32.mrf.mxu0
      %v641 = vadd.f32 %v261, %v640
      %642 = vmatmul.bf16.gmra.mxu0 %v423
      %v643 = vpop.f32.mrf.mxu0
      %v644 = vadd.f32 %v261, %v643
      %v645 = vpop.f32.mrf.mxu0
      %v646 = vadd.f32 %v261, %v645
      %647 = vmatmul.bf16.gmra.mxu0 %v425
      %v648 = vpop.f32.mrf.mxu0
      %v649 = vadd.f32 %v261, %v648
      %v650 = vpop.f32.mrf.mxu0
      %v651 = vadd.f32 %v261, %v650
      %652 = vmatmul.bf16.gmra.mxu0 %v427
      %v653 = vpop.f32.mrf.mxu0
      %v654 = vadd.f32 %v261, %v653
      %v655 = vpop.f32.mrf.mxu0
      %v656 = vadd.f32 %v261, %v655
      %657 = vmatmul.bf16.gmra.mxu0 %v429
      %v658 = vpop.f32.mrf.mxu0
      %v659 = vadd.f32 %v261, %v658
      %v660 = vpop.f32.mrf.mxu0
      %v661 = vadd.f32 %v261, %v660
      %662 = vmatmul.bf16.gmra.mxu0 %v431
      %v663 = vpop.f32.mrf.mxu0
      %v664 = vadd.f32 %v261, %v663
      %v665 = vpop.f32.mrf.mxu0
      %v666 = vadd.f32 %v261, %v665
      %667 = vmatmul.bf16.gmra.mxu0 %v433
      %v668 = vpop.f32.mrf.mxu0
      %v669 = vadd.f32 %v261, %v668
      %v670 = vpop.f32.mrf.mxu0
      %v671 = vadd.f32 %v261, %v670
      %672 = vmatmul.bf16.gmra.mxu0 %v435
      %v673 = vpop.f32.mrf.mxu0
      %v674 = vadd.f32 %v261, %v673
      %v675 = vpop.f32.mrf.mxu0
      %v676 = vadd.f32 %v261, %v675
      %677 = vmatmul.bf16.gmra.mxu0 %v437
      %v678 = vpop.f32.mrf.mxu0
      %v679 = vadd.f32 %v261, %v678
      %v680 = vpop.f32.mrf.mxu0
      %v681 = vadd.f32 %v261, %v680
      %682 = vmatmul.bf16.gmra.mxu0 %v439
      %v683 = vpop.f32.mrf.mxu0
      %v684 = vadd.f32 %v261, %v683
      %v685 = vpop.f32.mrf.mxu0
      %v686 = vadd.f32 %v261, %v685
      %687 = vmatmul.bf16.gmra.mxu0 %v441
      %v688 = vpop.f32.mrf.mxu0
      %v689 = vadd.f32 %v261, %v688
      %v690 = vpop.f32.mrf.mxu0
      %v691 = vadd.f32 %v261, %v690
      %692 = vmatmul.bf16.gmra.mxu0 %v443
      %v693 = vpop.f32.mrf.mxu0
      %v694 = vadd.f32 %v261, %v693
      %v695 = vpop.f32.mrf.mxu0
      %v696 = vadd.f32 %v261, %v695
      %697 = vmatmul.bf16.gmra.mxu0 %v445
      %v698 = vpop.f32.mrf.mxu0
      %v699 = vadd.f32 %v261, %v698
      %v700 = vpop.f32.mrf.mxu0
      %v701 = vadd.f32 %v261, %v700
      %702 = vmatmul.bf16.gmra.mxu0 %v447
      %v703 = vpop.f32.mrf.mxu0
      %v704 = vadd.f32 %v261, %v703
      %v705 = vpop.f32.mrf.mxu0
      %v706 = vadd.f32 %v261, %v705
      %707 = vmatmul.bf16.gmra.mxu0 %v449
      %v708 = vpop.f32.mrf.mxu0
      %v709 = vadd.f32 %v261, %v708
      %v710 = vpop.f32.mrf.mxu0
      %v711 = vadd.f32 %v261, %v710
      %712 = vmatmul.bf16.gmra.mxu0 %v451
      %v713 = vpop.f32.mrf.mxu0
      %v714 = vadd.f32 %v261, %v713
      %v715 = vpop.f32.mrf.mxu0
      %v716 = vadd.f32 %v261, %v715
      %717 = vmatmul.bf16.gmra.mxu0 %v453
      %v718 = vpop.f32.mrf.mxu0
      %v719 = vadd.f32 %v261, %v718
      %v720 = vpop.f32.mrf.mxu0
      %v721 = vadd.f32 %v261, %v720
      %722 = vmatmul.bf16.gmra.mxu0 %v455
      %v723 = vpop.f32.mrf.mxu0
      %v724 = vadd.f32 %v261, %v723
      %v725 = vpop.f32.mrf.mxu0
      %v726 = vadd.f32 %v261, %v725
      %727 = vmatmul.bf16.gmra.mxu0 %v457
      %v728 = vpop.f32.mrf.mxu0
      %v729 = vadd.f32 %v261, %v728
      %v730 = vpop.f32.mrf.mxu0
      %v731 = vadd.f32 %v261, %v730
      %732 = vmatmul.bf16.gmra.mxu0 %v459
      %v733 = vpop.f32.mrf.mxu0
      %v734 = vadd.f32 %v261, %v733
      %v735 = vpop.f32.mrf.mxu0
      %v736 = vadd.f32 %v261, %v735
      %737 = vmatmul.bf16.gmra.mxu0 %v461
      %v738 = vpop.f32.mrf.mxu0
      %v739 = vadd.f32 %v261, %v738
      %v740 = vpop.f32.mrf.mxu0
      %v741 = vadd.f32 %v261, %v740
      %742 = vdwg.mxu0
      %743 = vmatpush.bf16.msra.mxu0 %v592
      %744 = vmatpush.bf16.msra.mxu0 %v591
      %745 = vmatpush.bf16.msra.mxu0 %v590
      %746 = vmatpush.bf16.msra.mxu0 %v589
      %747 = vmatpush.bf16.msra.mxu0 %v588
      %748 = vmatpush.bf16.msra.mxu0 %v587
      %749 = vmatpush.bf16.msra.mxu0 %v586
      %750 = vmatpush.bf16.msra.mxu0 %v585
      %751 = vmatmul.bf16.gmra.mxu0 %v414
      %v752 = vpop.f32.mrf.mxu0
      %v753 = vadd.f32 %v619, %v752
      %v754 = vpop.f32.mrf.mxu0
      %v755 = vadd.f32 %v621, %v754
      %756 = vmatmul.bf16.gmra.mxu0 %v416
      %v757 = vpop.f32.mrf.mxu0
      %v758 = vadd.f32 %v624, %v757
      %v759 = vpop.f32.mrf.mxu0
      %v760 = vadd.f32 %v626, %v759
      %761 = vmatmul.bf16.gmra.mxu0 %v418
      %v762 = vpop.f32.mrf.mxu0
      %v763 = vadd.f32 %v629, %v762
      %v764 = vpop.f32.mrf.mxu0
      %v765 = vadd.f32 %v631, %v764
      %766 = vmatmul.bf16.gmra.mxu0 %v420
      %v767 = vpop.f32.mrf.mxu0
      %v768 = vadd.f32 %v634, %v767
      %v769 = vpop.f32.mrf.mxu0
      %v770 = vadd.f32 %v636, %v769
      %771 = vmatmul.bf16.gmra.mxu0 %v422
      %v772 = vpop.f32.mrf.mxu0
      %v773 = vadd.f32 %v639, %v772
      %v774 = vpop.f32.mrf.mxu0
      %v775 = vadd.f32 %v641, %v774
      %776 = vmatmul.bf16.gmra.mxu0 %v424
      %v777 = vpop.f32.mrf.mxu0
      %v778 = vadd.f32 %v644, %v777
      %v779 = vpop.f32.mrf.mxu0
      %v780 = vadd.f32 %v646, %v779
      %781 = vmatmul.bf16.gmra.mxu0 %v426
      %v782 = vpop.f32.mrf.mxu0
      %v783 = vadd.f32 %v649, %v782
      %v784 = vpop.f32.mrf.mxu0
      %v785 = vadd.f32 %v651, %v784
      %786 = vmatmul.bf16.gmra.mxu0 %v428
      %v787 = vpop.f32.mrf.mxu0
      %v788 = vadd.f32 %v654, %v787
      %v789 = vpop.f32.mrf.mxu0
      %v790 = vadd.f32 %v656, %v789
      %791 = vmatmul.bf16.gmra.mxu0 %v430
      %v792 = vpop.f32.mrf.mxu0
      %v793 = vadd.f32 %v659, %v792
      %v794 = vpop.f32.mrf.mxu0
      %v795 = vadd.f32 %v661, %v794
      %796 = vmatmul.bf16.gmra.mxu0 %v432
      %v797 = vpop.f32.mrf.mxu0
      %v798 = vadd.f32 %v664, %v797
      %v799 = vpop.f32.mrf.mxu0
      %v800 = vadd.f32 %v666, %v799
      %801 = vmatmul.bf16.gmra.mxu0 %v434
      %v802 = vpop.f32.mrf.mxu0
      %v803 = vadd.f32 %v669, %v802
      %v804 = vpop.f32.mrf.mxu0
      %v805 = vadd.f32 %v671, %v804
      %806 = vmatmul.bf16.gmra.mxu0 %v436
      %v807 = vpop.f32.mrf.mxu0
      %v808 = vadd.f32 %v674, %v807
      %v809 = vpop.f32.mrf.mxu0
      %v810 = vadd.f32 %v676, %v809
      %811 = vmatmul.bf16.gmra.mxu0 %v438
      %v812 = vpop.f32.mrf.mxu0
      %v813 = vadd.f32 %v679, %v812
      %v814 = vpop.f32.mrf.mxu0
      %v815 = vadd.f32 %v681, %v814
      %816 = vmatmul.bf16.gmra.mxu0 %v440
      %v817 = vpop.f32.mrf.mxu0
      %v818 = vadd.f32 %v684, %v817
      %v819 = vpop.f32.mrf.mxu0
      %v820 = vadd.f32 %v686, %v819
      %821 = vmatmul.bf16.gmra.mxu0 %v442
      %v822 = vpop.f32.mrf.mxu0
      %v823 = vadd.f32 %v689, %v822
      %v824 = vpop.f32.mrf.mxu0
      %v825 = vadd.f32 %v691, %v824
      %826 = vmatmul.bf16.gmra.mxu0 %v444
      %v827 = vpop.f32.mrf.mxu0
      %v828 = vadd.f32 %v694, %v827
      %v829 = vpop.f32.mrf.mxu0
      %v830 = vadd.f32 %v696, %v829
      %831 = vmatmul.bf16.gmra.mxu0 %v446
      %v832 = vpop.f32.mrf.mxu0
      %v833 = vadd.f32 %v699, %v832
      %v834 = vpop.f32.mrf.mxu0
      %v835 = vadd.f32 %v701, %v834
      %836 = vmatmul.bf16.gmra.mxu0 %v448
      %v837 = vpop.f32.mrf.mxu0
      %v838 = vadd.f32 %v704, %v837
      %v839 = vpop.f32.mrf.mxu0
      %v840 = vadd.f32 %v706, %v839
      %841 = vmatmul.bf16.gmra.mxu0 %v450
      %v842 = vpop.f32.mrf.mxu0
      %v843 = vadd.f32 %v709, %v842
      %v844 = vpop.f32.mrf.mxu0
      %v845 = vadd.f32 %v711, %v844
      %846 = vmatmul.bf16.gmra.mxu0 %v452
      %v847 = vpop.f32.mrf.mxu0
      %v848 = vadd.f32 %v714, %v847
      %v849 = vpop.f32.mrf.mxu0
      %v850 = vadd.f32 %v716, %v849
      %851 = vmatmul.bf16.gmra.mxu0 %v454
      %v852 = vpop.f32.mrf.mxu0
      %v853 = vadd.f32 %v719, %v852
      %v854 = vpop.f32.mrf.mxu0
      %v855 = vadd.f32 %v721, %v854
      %856 = vmatmul.bf16.gmra.mxu0 %v456
      %v857 = vpop.f32.mrf.mxu0
      %v858 = vadd.f32 %v724, %v857
      %v859 = vpop.f32.mrf.mxu0
      %v860 = vadd.f32 %v726, %v859
      %861 = vmatmul.bf16.gmra.mxu0 %v458
      %v862 = vpop.f32.mrf.mxu0
      %v863 = vadd.f32 %v729, %v862
      %v864 = vpop.f32.mrf.mxu0
      %v865 = vadd.f32 %v731, %v864
      %866 = vmatmul.bf16.gmra.mxu0 %v460
      %v867 = vpop.f32.mrf.mxu0
      %v868 = vadd.f32 %v734, %v867
      %v869 = vpop.f32.mrf.mxu0
      %v870 = vadd.f32 %v736, %v869
      %871 = vmatmul.bf16.gmra.mxu0 %v462
      %v872 = vpop.f32.mrf.mxu0
      %v873 = vadd.f32 %v739, %v872
      %v874 = vpop.f32.mrf.mxu0
      %v875 = vadd.f32 %v741, %v874
      %876 = vdwg.mxu0
      %v877 = vmax.f32 %v753, 0.0
      %v878 = vmax.f32 %v755, 0.0
      %v879 = vmax.f32 %v758, 0.0
      %v880 = vmax.f32 %v760, 0.0
      %v881 = vmax.f32 %v763, 0.0
      %v882 = vmax.f32 %v765, 0.0
      %v883 = vmax.f32 %v768, 0.0
      %v884 = vmax.f32 %v770, 0.0
      %v885 = vmax.f32 %v773, 0.0
      %v886 = vmax.f32 %v775, 0.0
      %v887 = vmax.f32 %v778, 0.0
      %v888 = vmax.f32 %v780, 0.0
      %v889 = vmax.f32 %v783, 0.0
      %v890 = vmax.f32 %v785, 0.0
      %v891 = vmax.f32 %v788, 0.0
      %v892 = vmax.f32 %v790, 0.0
      %v893 = vmax.f32 %v793, 0.0
      %v894 = vmax.f32 %v795, 0.0
      %v895 = vmax.f32 %v798, 0.0
      %v896 = vmax.f32 %v800, 0.0
      %v897 = vmax.f32 %v803, 0.0
      %v898 = vmax.f32 %v805, 0.0
      %v899 = vmax.f32 %v808, 0.0
      %v900 = vmax.f32 %v810, 0.0
      %v901 = vmax.f32 %v813, 0.0
      %v902 = vmax.f32 %v815, 0.0
      %v903 = vmax.f32 %v818, 0.0
      %v904 = vmax.f32 %v820, 0.0
      %v905 = vmax.f32 %v823, 0.0
      %v906 = vmax.f32 %v825, 0.0
      %v907 = vmax.f32 %v828, 0.0
      %v908 = vmax.f32 %v830, 0.0
      %v909 = vmax.f32 %v833, 0.0
      %v910 = vmax.f32 %v835, 0.0
      %v911 = vmax.f32 %v838, 0.0
      %v912 = vmax.f32 %v840, 0.0
      %v913 = vmax.f32 %v843, 0.0
      %v914 = vmax.f32 %v845, 0.0
      %v915 = vmax.f32 %v848, 0.0
      %v916 = vmax.f32 %v850, 0.0
      %v917 = vmax.f32 %v853, 0.0
      %v918 = vmax.f32 %v855, 0.0
      %v919 = vmax.f32 %v858, 0.0
      %v920 = vmax.f32 %v860, 0.0
      %v921 = vmax.f32 %v863, 0.0
      %v922 = vmax.f32 %v865, 0.0
      %v923 = vmax.f32 %v868, 0.0
      %v924 = vmax.f32 %v870, 0.0
      %v925 = vmax.f32 %v873, 0.0
      %v926 = vmax.f32 %v875, 0.0
      %v927 = vpack.c.bf16 %v877, %v877
      %v928 = vpack.c.bf16 %v878, %v878
      %v929 = vpack.c.bf16 %v879, %v879
      %v930 = vpack.c.bf16 %v880, %v880
      %v931 = vpack.c.bf16 %v881, %v881
      %v932 = vpack.c.bf16 %v882, %v882
      %v933 = vpack.c.bf16 %v883, %v883
      %v934 = vpack.c.bf16 %v884, %v884
      %v935 = vpack.c.bf16 %v885, %v885
      %v936 = vpack.c.bf16 %v886, %v886
      %v937 = vpack.c.bf16 %v887, %v887
      %v938 = vpack.c.bf16 %v888, %v888
      %v939 = vpack.c.bf16 %v889, %v889
      %v940 = vpack.c.bf16 %v890, %v890
      %v941 = vpack.c.bf16 %v891, %v891
      %v942 = vpack.c.bf16 %v892, %v892
      %v943 = vpack.c.bf16 %v893, %v893
      %v944 = vpack.c.bf16 %v894, %v894
      %v945 = vpack.c.bf16 %v895, %v895
      %v946 = vpack.c.bf16 %v896, %v896
      %v947 = vpack.c.bf16 %v897, %v897
      %v948 = vpack.c.bf16 %v898, %v898
      %v949 = vpack.c.bf16 %v899, %v899
      %v950 = vpack.c.bf16 %v900, %v900
      %v951 = vpack.c.bf16 %v901, %v901
      %v952 = vpack.c.bf16 %v902, %v902
      %v953 = vpack.c.bf16 %v903, %v903
      %v954 = vpack.c.bf16 %v904, %v904
      %v955 = vpack.c.bf16 %v905, %v905
      %v956 = vpack.c.bf16 %v906, %v906
      %v957 = vpack.c.bf16 %v907, %v907
      %v958 = vpack.c.bf16 %v908, %v908
      %v959 = vpack.c.bf16 %v909, %v909
      %v960 = vpack.c.bf16 %v910, %v910
      %v961 = vpack.c.bf16 %v911, %v911
      %v962 = vpack.c.bf16 %v912, %v912
      %v963 = vpack.c.bf16 %v913, %v913
      %v964 = vpack.c.bf16 %v914, %v914
      %v965 = vpack.c.bf16 %v915, %v915
      %v966 = vpack.c.bf16 %v916, %v916
      %v967 = vpack.c.bf16 %v917, %v917
      %v968 = vpack.c.bf16 %v918, %v918
      %v969 = vpack.c.bf16 %v919, %v919
      %v970 = vpack.c.bf16 %v920, %v920
      %v971 = vpack.c.bf16 %v921, %v921
      %v972 = vpack.c.bf16 %v922, %v922
      %v973 = vpack.c.bf16 %v923, %v923
      %v974 = vpack.c.bf16 %v924, %v924
      %v975 = vpack.c.bf16 %v925, %v925
      %v976 = vpack.c.bf16 %v926, %v926
      %vm977 = vcmask 257024
      %978 = vst.msk [vmem:[%s175] sm:$0xf] %vm977, %v927
      %979 = vst.msk [vmem:[%s175 + $0x4] sm:$0xf] %vm977, %v928
      %980 = vst.msk [vmem:[%s175 + $0x8] sm:$0xf] %vm977, %v929
      %981 = vst.msk [vmem:[%s175 + $0xc] sm:$0xf] %vm977, %v930
      %982 = vst.msk [vmem:[%s175 + $0x10] sm:$0xf] %vm977, %v931
      %983 = vst.msk [vmem:[%s175 + $0x14] sm:$0xf] %vm977, %v932
      %984 = vst.msk [vmem:[%s175 + $0x18] sm:$0xf] %vm977, %v933
      %985 = vst.msk [vmem:[%s175 + $0x1c] sm:$0xf] %vm977, %v934
      %986 = vst.msk [vmem:[%s175 + $0x20] sm:$0xf] %vm977, %v935
      %987 = vst.msk [vmem:[%s175 + $0x24] sm:$0xf] %vm977, %v936
      %988 = vst.msk [vmem:[%s175 + $0x28] sm:$0xf] %vm977, %v937
      %989 = vst.msk [vmem:[%s175 + $0x2c] sm:$0xf] %vm977, %v938
      %990 = vst.msk [vmem:[%s175 + $0x30] sm:$0xf] %vm977, %v939
      %991 = vst.msk [vmem:[%s175 + $0x34] sm:$0xf] %vm977, %v940
      %992 = vst.msk [vmem:[%s175 + $0x38] sm:$0xf] %vm977, %v941
      %993 = vst.msk [vmem:[%s175 + $0x3c] sm:$0xf] %vm977, %v942
      %994 = vst.msk [vmem:[%s175 + $0x40] sm:$0xf] %vm977, %v943
      %995 = vst.msk [vmem:[%s175 + $0x44] sm:$0xf] %vm977, %v944
      %996 = vst.msk [vmem:[%s175 + $0x48] sm:$0xf] %vm977, %v945
      %997 = vst.msk [vmem:[%s175 + $0x4c] sm:$0xf] %vm977, %v946
      %998 = vst.msk [vmem:[%s175 + $0x50] sm:$0xf] %vm977, %v947
      %999 = vst.msk [vmem:[%s175 + $0x54] sm:$0xf] %vm977, %v948
      %1000 = vst.msk [vmem:[%s175 + $0x58] sm:$0xf] %vm977, %v949
      %1001 = vst.msk [vmem:[%s175 + $0x5c] sm:$0xf] %vm977, %v950
      %1002 = vst.msk [vmem:[%s175 + $0x60] sm:$0xf] %vm977, %v951
      %1003 = vst.msk [vmem:[%s175 + $0x64] sm:$0xf] %vm977, %v952
      %1004 = vst.msk [vmem:[%s175 + $0x68] sm:$0xf] %vm977, %v953
      %1005 = vst.msk [vmem:[%s175 + $0x6c] sm:$0xf] %vm977, %v954
      %1006 = vst.msk [vmem:[%s175 + $0x70] sm:$0xf] %vm977, %v955
      %1007 = vst.msk [vmem:[%s175 + $0x74] sm:$0xf] %vm977, %v956
      %1008 = vst.msk [vmem:[%s175 + $0x78] sm:$0xf] %vm977, %v957
      %1009 = vst.msk [vmem:[%s175 + $0x7c] sm:$0xf] %vm977, %v958
      %1010 = vst.msk [vmem:[%s175 + $0x80] sm:$0xf] %vm977, %v959
      %1011 = vst.msk [vmem:[%s175 + $0x84] sm:$0xf] %vm977, %v960
      %1012 = vst.msk [vmem:[%s175 + $0x88] sm:$0xf] %vm977, %v961
      %1013 = vst.msk [vmem:[%s175 + $0x8c] sm:$0xf] %vm977, %v962
      %1014 = vst.msk [vmem:[%s175 + $0x90] sm:$0xf] %vm977, %v963
      %1015 = vst.msk [vmem:[%s175 + $0x94] sm:$0xf] %vm977, %v964
      %1016 = vst.msk [vmem:[%s175 + $0x98] sm:$0xf] %vm977, %v965
      %1017 = vst.msk [vmem:[%s175 + $0x9c] sm:$0xf] %vm977, %v966
      %1018 = vst.msk [vmem:[%s175 + $0xa0] sm:$0xf] %vm977, %v967
      %1019 = vst.msk [vmem:[%s175 + $0xa4] sm:$0xf] %vm977, %v968
      %1020 = vst.msk [vmem:[%s175 + $0xa8] sm:$0xf] %vm977, %v969
      %1021 = vst.msk [vmem:[%s175 + $0xac] sm:$0xf] %vm977, %v970
      %1022 = vst.msk [vmem:[%s175 + $0xb0] sm:$0xf] %vm977, %v971
      %1023 = vst.msk [vmem:[%s175 + $0xb4] sm:$0xf] %vm977, %v972
      %1024 = vst.msk [vmem:[%s175 + $0xb8] sm:$0xf] %vm977, %v973
      %1025 = vst.msk [vmem:[%s175 + $0xbc] sm:$0xf] %vm977, %v974
      %1026 = vst.msk [vmem:[%s175 + $0xc0] sm:$0xf] %vm977, %v975
      %1027 = vst.msk [vmem:[%s175 + $0xc4] sm:$0xf] %vm977, %v976
      %s1028 = smul.u32 50, %s14
      %p1029 = scmp.lt.s32.totalorder %s1028, 99
      %s1030 = scalar_select %p1029, %s1028, 99
      %s1031 = smul.addr %s1030, 4
      %s1032 = scalar_lea.vmem %s3, %s1031
      // Predicated region
      $region33: #{dqn_forward.3} parent=31 // pred_check
        %p1033 = pneg %p100
      $region34: #{dqn_forward.3} parent=31 // pred_check_branch
        %1035 = sbr.rel (%p1033) target = $region36
      $region35: #{dqn_forward.3} parent=31 // pred_region
        %s1036 = smul.u32 50, %s14
      $region36: #{dqn_forward.3} parent=31 // pred_fallthru
        _
    $region32: #{dqn_forward.3} parent=5 // pred_fallthru
      _
    %p1037 = scmp.le.s32.totalorder 2, %s9
    // Predicated region
    $region37: #{dqn_forward.3} parent=5 // pred_check
      %p1038 = pneg %p1037
    $region38: #{dqn_forward.3} parent=5 // pred_check_branch
      %1040 = sbr.rel (%p1038) target = $region40
    $region39: #{dqn_forward.3} parent=5 // pred_region
      %s1041 = ssub.s32 %s9, 2
      // Predicated region
      $region41: #{dqn_forward.3} parent=39 // pred_check
        %p1042 = pneg %p106
      $region42: #{dqn_forward.3} parent=39 // pred_check_branch
        %1044 = sbr.rel (%p1042) target = $region44
      $region43: #{dqn_forward.3} parent=39 // pred_region
        %s1045 = smul.u32 50, %s15
        %p1046 = scmp.lt.s32.totalorder %s1045, 99
        %s1047 = scalar_select %p1046, %s1045, 99
        %s1048 = smul.addr %s1047, 4
        %s1049 = scalar_lea.vmem %s3, %s1048
      $region44: #{dqn_forward.3} parent=39 // pred_fallthru
        _
    $region40: #{dqn_forward.3} parent=5 // pred_fallthru
      _
  $region6: #{dqn_forward.3} parent=0 // loop_footer
    %s13 = sadd.s32 1, %s9
  $region7: #{dqn_forward.3} parent=0 // loop_footer_branch
    %8 = sbr.rel target = $region3
  $region8: #{dqn_forward.3} parent=0 // loop_exit
    _

// kernel: dqn_forward.4
$region0: #{dqn_forward.4}
  #allocation0 [shape = 'u32[]', space=smem, size = 0x4, offset = 0x4, fixed_abs, tag = 'smem constant byte address 0x4 - core index']
  #allocation1 [shape = 'u32[72,128]{1,0:T(1,128)}', space=vmem, size = 0x9000, scoped, tag = 'internal scratch']
  %s0 = inlined_call_operand.vmem [shape: bf16[162,512], index: 0, kind: input, shape index: {}]
  %s1 = inlined_call_operand.vmem [shape: bf16[512,64], index: 1, kind: input, shape index: {}]
  %s2 = inlined_call_operand.vmem [shape: f32[1,64], index: 2, kind: input, shape index: {}]
  %s3 = inlined_call_operand.vmem [shape: bf16[162,64], index: 3, kind: output, shape index: {}]
  %s4 = sld [smem:[#allocation0]]
  $region22: #{dqn_forward.4} parent=0
    _
  %s6 = ssub.s32 1, %s4
  %s7 = scalar_select 0, %s6, %s4
  // Predicated region
  $region2: #{dqn_forward.4} parent=0 // pred_check
    _
  $region3: #{dqn_forward.4} parent=0 // pred_check_branch
    %9 = sbr.rel (0) target = $region5
  $region4: #{dqn_forward.4} parent=0 // pred_region
    _
  $region5: #{dqn_forward.4} parent=0 // pred_fallthru
    _
  // Predicated region
  $region6: #{dqn_forward.4} parent=0 // pred_check
    _
  $region7: #{dqn_forward.4} parent=0 // pred_check_branch
    %11 = sbr.rel (0) target = $region9
  $region8: #{dqn_forward.4} parent=0 // pred_region
    _
  $region9: #{dqn_forward.4} parent=0 // pred_fallthru
    _
  // Predicated region
  $region10: #{dqn_forward.4} parent=0 // pred_check
    _
  $region11: #{dqn_forward.4} parent=0 // pred_check_branch
    %13 = sbr.rel (0) target = $region13
  $region12: #{dqn_forward.4} parent=0 // pred_region
    _
  $region13: #{dqn_forward.4} parent=0 // pred_fallthru
    _
  %v14 = vld [vmem:[%s0] sm:$0xff]
  %v15 = vld [vmem:[%s0 + $0x8] sm:$0xff]
  %v16 = vld [vmem:[%s0 + $0x10] sm:$0xff]
  %v17 = vld [vmem:[%s0 + $0x18] sm:$0xff]
  %v18 = vld [vmem:[%s0 + $0x20] sm:$0xff]
  %v19 = vld [vmem:[%s0 + $0x28] sm:$0xff]
  %v20 = vld [vmem:[%s0 + $0x30] sm:$0xff]
  %v21 = vld [vmem:[%s0 + $0x38] sm:$0xff]
  %v22 = vld [vmem:[%s0 + $0x40] sm:$0xff]
  %v23 = vld [vmem:[%s0 + $0x48] sm:$0xff]
  %v24 = vld [vmem:[%s0 + $0x50] sm:$0xff]
  %v25 = vld [vmem:[%s0 + $0x58] sm:$0xff]
  %v26 = vld [vmem:[%s0 + $0x60] sm:$0xff]
  %v27 = vld [vmem:[%s0 + $0x68] sm:$0xff]
  %v28 = vld [vmem:[%s0 + $0x70] sm:$0xff]
  %v29 = vld [vmem:[%s0 + $0x78] sm:$0xff]
  %v30 = vld [vmem:[%s0 + $0x80] sm:$0xff]
  %v31 = vld [vmem:[%s0 + $0x88] sm:$0xff]
  %v32 = vld [vmem:[%s0 + $0x90] sm:$0xff]
  %v33 = vld [vmem:[%s0 + $0x98] sm:$0xff]
  %v34 = vld [vmem:[%s0 + $0xa0] sm:$0xff]
  %v35 = vld [vmem:[%s0 + $0xa8] sm:$0xff]
  %v36 = vld [vmem:[%s0 + $0xb0] sm:$0xff]
  %v37 = vld [vmem:[%s0 + $0xb8] sm:$0xff]
  %v38 = vld [vmem:[%s0 + $0xc0] sm:$0xff]
  %v39 = vld [vmem:[%s0 + $0xc8] sm:$0xff]
  %v40 = vld [vmem:[%s0 + $0xd0] sm:$0xff]
  %v41 = vld [vmem:[%s0 + $0xd8] sm:$0xff]
  %v42 = vld [vmem:[%s0 + $0xe0] sm:$0xff]
  %v43 = vld [vmem:[%s0 + $0xe8] sm:$0xff]
  %v44 = vld [vmem:[%s0 + $0xf0] sm:$0xff]
  %v45 = vld [vmem:[%s0 + $0xf8] sm:$0xff]
  %v46 = vld [vmem:[%s0 + $0x100] sm:$0xff]
  %v47 = vld [vmem:[%s0 + $0x108] sm:$0xff]
  %v48 = vld [vmem:[%s0 + $0x110] sm:$0xff]
  %v49 = vld [vmem:[%s0 + $0x118] sm:$0xff]
  %v50 = vld [vmem:[%s0 + $0x120] sm:$0xff]
  %v51 = vld [vmem:[%s0 + $0x128] sm:$0xff]
  %v52 = vld [vmem:[%s0 + $0x130] sm:$0xff]
  %v53 = vld [vmem:[%s0 + $0x138] sm:$0xff]
  %v54 = vld [vmem:[%s0 + $0x140] sm:$0x11]
  %v55 = vld [vmem:[%s0 + $0x148] sm:$0x11]
  %v56 = vld [vmem:[%s1] sm:$0xf]
  %v57 = vld [vmem:[%s1 + $0x4] sm:$0xf]
  %v58 = vld [vmem:[%s1 + $0x8] sm:$0xf]
  %v59 = vld [vmem:[%s1 + $0xc] sm:$0xf]
  %v60 = vld [vmem:[%s1 + $0x10] sm:$0xf]
  %v61 = vld [vmem:[%s1 + $0x14] sm:$0xf]
  %v62 = vld [vmem:[%s1 + $0x18] sm:$0xf]
  %v63 = vld [vmem:[%s1 + $0x1c] sm:$0xf]
  %v64 = vld [vmem:[%s1 + $0x20] sm:$0xf]
  %v65 = vld [vmem:[%s1 + $0x24] sm:$0xf]
  %v66 = vld [vmem:[%s1 + $0x28] sm:$0xf]
  %v67 = vld [vmem:[%s1 + $0x2c] sm:$0xf]
  %v68 = vld [vmem:[%s1 + $0x30] sm:$0xf]
  %v69 = vld [vmem:[%s1 + $0x34] sm:$0xf]
  %v70 = vld [vmem:[%s1 + $0x38] sm:$0xf]
  %v71 = vld [vmem:[%s1 + $0x3c] sm:$0xf]
  %v72 = vld [vmem:[%s1 + $0x40] sm:$0xf]
  %v73 = vld [vmem:[%s1 + $0x44] sm:$0xf]
  %v74 = vld [vmem:[%s1 + $0x48] sm:$0xf]
  %v75 = vld [vmem:[%s1 + $0x4c] sm:$0xf]
  %v76 = vld [vmem:[%s1 + $0x50] sm:$0xf]
  %v77 = vld [vmem:[%s1 + $0x54] sm:$0xf]
  %v78 = vld [vmem:[%s1 + $0x58] sm:$0xf]
  %v79 = vld [vmem:[%s1 + $0x5c] sm:$0xf]
  %v80 = vld [vmem:[%s1 + $0x60] sm:$0xf]
  %v81 = vld [vmem:[%s1 + $0x64] sm:$0xf]
  %v82 = vld [vmem:[%s1 + $0x68] sm:$0xf]
  %v83 = vld [vmem:[%s1 + $0x6c] sm:$0xf]
  %v84 = vld [vmem:[%s1 + $0x70] sm:$0xf]
  %v85 = vld [vmem:[%s1 + $0x74] sm:$0xf]
  %v86 = vld [vmem:[%s1 + $0x78] sm:$0xf]
  %v87 = vld [vmem:[%s1 + $0x7c] sm:$0xf]
  %v88 = vld [vmem:[%s1 + $0x80] sm:$0xf]
  %v89 = vld [vmem:[%s1 + $0x84] sm:$0xf]
  %v90 = vld [vmem:[%s1 + $0x88] sm:$0xf]
  %v91 = vld [vmem:[%s1 + $0x8c] sm:$0xf]
  %v92 = vld [vmem:[%s1 + $0x90] sm:$0xf]
  %v93 = vld [vmem:[%s1 + $0x94] sm:$0xf]
  %v94 = vld [vmem:[%s1 + $0x98] sm:$0xf]
  %v95 = vld [vmem:[%s1 + $0x9c] sm:$0xf]
  %v96 = vld [vmem:[%s1 + $0xa0] sm:$0xf]
  %v97 = vld [vmem:[%s1 + $0xa4] sm:$0xf]
  %v98 = vld [vmem:[%s1 + $0xa8] sm:$0xf]
  %v99 = vld [vmem:[%s1 + $0xac] sm:$0xf]
  %v100 = vld [vmem:[%s1 + $0xb0] sm:$0xf]
  %v101 = vld [vmem:[%s1 + $0xb4] sm:$0xf]
  %v102 = vld [vmem:[%s1 + $0xb8] sm:$0xf]
  %v103 = vld [vmem:[%s1 + $0xbc] sm:$0xf]
  %v104 = vld [vmem:[%s1 + $0xc0] sm:$0xf]
  %v105 = vld [vmem:[%s1 + $0xc4] sm:$0xf]
  %v106 = vld [vmem:[%s1 + $0xc8] sm:$0xf]
  %v107 = vld [vmem:[%s1 + $0xcc] sm:$0xf]
  %v108 = vld [vmem:[%s1 + $0xd0] sm:$0xf]
  %v109 = vld [vmem:[%s1 + $0xd4] sm:$0xf]
  %v110 = vld [vmem:[%s1 + $0xd8] sm:$0xf]
  %v111 = vld [vmem:[%s1 + $0xdc] sm:$0xf]
  %v112 = vld [vmem:[%s1 + $0xe0] sm:$0xf]
  %v113 = vld [vmem:[%s1 + $0xe4] sm:$0xf]
  %v114 = vld [vmem:[%s1 + $0xe8] sm:$0xf]
  %v115 = vld [vmem:[%s1 + $0xec] sm:$0xf]
  %v116 = vld [vmem:[%s1 + $0xf0] sm:$0xf]
  %v117 = vld [vmem:[%s1 + $0xf4] sm:$0xf]
  %v118 = vld [vmem:[%s1 + $0xf8] sm:$0xf]
  %v119 = vld [vmem:[%s1 + $0xfc] sm:$0xf]
  %v120 = vld [vmem:[%s2] sm:$0x1]
  %v122 = vperm.slane %v120, 0
  %v166 = vunpack.c.l.b16 %v14
  %v167 = vunpack.c.h.b16 %v14
  %v168 = vunpack.c.l.b16 %v15
  %v169 = vunpack.c.h.b16 %v15
  %v170 = vunpack.c.l.b16 %v16
  %v171 = vunpack.c.h.b16 %v16
  %v172 = vunpack.c.l.b16 %v17
  %v173 = vunpack.c.h.b16 %v17
  %v174 = vunpack.c.l.b16 %v18
  %v175 = vunpack.c.h.b16 %v18
  %v176 = vunpack.c.l.b16 %v19
  %v177 = vunpack.c.h.b16 %v19
  %v178 = vunpack.c.l.b16 %v20
  %v179 = vunpack.c.h.b16 %v20
  %v180 = vunpack.c.l.b16 %v21
  %v181 = vunpack.c.h.b16 %v21
  %v182 = vunpack.c.l.b16 %v22
  %v183 = vunpack.c.h.b16 %v22
  %v184 = vunpack.c.l.b16 %v23
  %v185 = vunpack.c.h.b16 %v23
  %v186 = vunpack.c.l.b16 %v24
  %v187 = vunpack.c.h.b16 %v24
  %v188 = vunpack.c.l.b16 %v25
  %v189 = vunpack.c.h.b16 %v25
  %v190 = vunpack.c.l.b16 %v26
  %v191 = vunpack.c.h.b16 %v26
  %v192 = vunpack.c.l.b16 %v27
  %v193 = vunpack.c.h.b16 %v27
  %v194 = vunpack.c.l.b16 %v28
  %v195 = vunpack.c.h.b16 %v28
  %v196 = vunpack.c.l.b16 %v29
  %v197 = vunpack.c.h.b16 %v29
  %v198 = vunpack.c.l.b16 %v30
  %v199 = vunpack.c.h.b16 %v30
  %v200 = vunpack.c.l.b16 %v31
  %v201 = vunpack.c.h.b16 %v31
  %v202 = vunpack.c.l.b16 %v32
  %v203 = vunpack.c.h.b16 %v32
  %v204 = vunpack.c.l.b16 %v33
  %v205 = vunpack.c.h.b16 %v33
  %v206 = vunpack.c.l.b16 %v34
  %v207 = vunpack.c.h.b16 %v34
  %v208 = vunpack.c.l.b16 %v35
  %v209 = vunpack.c.h.b16 %v35
  %v210 = vunpack.c.l.b16 %v36
  %v211 = vunpack.c.h.b16 %v36
  %v212 = vunpack.c.l.b16 %v37
  %v213 = vunpack.c.h.b16 %v37
  %v214 = vunpack.c.l.b16 %v38
  %v215 = vunpack.c.h.b16 %v38
  %v216 = vunpack.c.l.b16 %v39
  %v217 = vunpack.c.h.b16 %v39
  %v218 = vunpack.c.l.b16 %v40
  %v219 = vunpack.c.h.b16 %v40
  %v220 = vunpack.c.l.b16 %v41
  %v221 = vunpack.c.h.b16 %v41
  %v222 = vunpack.c.l.b16 %v42
  %v223 = vunpack.c.h.b16 %v42
  %v224 = vunpack.c.l.b16 %v43
  %v225 = vunpack.c.h.b16 %v43
  %v226 = vunpack.c.l.b16 %v44
  %v227 = vunpack.c.h.b16 %v44
  %v228 = vunpack.c.l.b16 %v45
  %v229 = vunpack.c.h.b16 %v45
  %v230 = vunpack.c.l.b16 %v46
  %v231 = vunpack.c.h.b16 %v46
  %v232 = vunpack.c.l.b16 %v47
  %v233 = vunpack.c.h.b16 %v47
  %v234 = vunpack.c.l.b16 %v48
  %v235 = vunpack.c.h.b16 %v48
  %v236 = vunpack.c.l.b16 %v49
  %v237 = vunpack.c.h.b16 %v49
  %v238 = vunpack.c.l.b16 %v50
  %v239 = vunpack.c.h.b16 %v50
  %v240 = vunpack.c.l.b16 %v51
  %v241 = vunpack.c.h.b16 %v51
  %v242 = vunpack.c.l.b16 %v52
  %v243 = vunpack.c.h.b16 %v52
  %v244 = vunpack.c.l.b16 %v53
  %v245 = vunpack.c.h.b16 %v53
  %v246 = vunpack.c.l.b16 %v54
  %v247 = vunpack.c.h.b16 %v54
  %v248 = vunpack.c.l.b16 %v55
  %v249 = vunpack.c.h.b16 %v55
  %v250 = vpack.c.b16 %v170, %v166
  %v251 = vpack.c.b16 %v171, %v167
  %v252 = vpack.c.b16 %v172, %v168
  %v253 = vpack.c.b16 %v173, %v169
  %v254 = vpack.c.b16 %v178, %v174
  %v255 = vpack.c.b16 %v179, %v175
  %v256 = vpack.c.b16 %v180, %v176
  %v257 = vpack.c.b16 %v181, %v177
  %v258 = vpack.c.b16 %v186, %v182
  %v259 = vpack.c.b16 %v187, %v183
  %v260 = vpack.c.b16 %v188, %v184
  %v261 = vpack.c.b16 %v189, %v185
  %v262 = vpack.c.b16 %v194, %v190
  %v263 = vpack.c.b16 %v195, %v191
  %v264 = vpack.c.b16 %v196, %v192
  %v265 = vpack.c.b16 %v197, %v193
  %v266 = vpack.c.b16 %v202, %v198
  %v267 = vpack.c.b16 %v203, %v199
  %v268 = vpack.c.b16 %v204, %v200
  %v269 = vpack.c.b16 %v205, %v201
  %v270 = vpack.c.b16 %v210, %v206
  %v271 = vpack.c.b16 %v211, %v207
  %v272 = vpack.c.b16 %v212, %v208
  %v273 = vpack.c.b16 %v213, %v209
  %v274 = vpack.c.b16 %v218, %v214
  %v275 = vpack.c.b16 %v219, %v215
  %v276 = vpack.c.b16 %v220, %v216
  %v277 = vpack.c.b16 %v221, %v217
  %v278 = vpack.c.b16 %v226, %v222
  %v279 = vpack.c.b16 %v227, %v223
  %v280 = vpack.c.b16 %v228, %v224
  %v281 = vpack.c.b16 %v229, %v225
  %v282 = vpack.c.b16 %v234, %v230
  %v283 = vpack.c.b16 %v235, %v231
  %v284 = vpack.c.b16 %v236, %v232
  %v285 = vpack.c.b16 %v237, %v233
  %v286 = vpack.c.b16 %v242, %v238
  %v287 = vpack.c.b16 %v243, %v239
  %v288 = vpack.c.b16 %v244, %v240
  %v289 = vpack.c.b16 %v245, %v241
  %v290 = vpack.c.b16 %v246, %v246
  %v291 = vpack.c.b16 %v247, %v247
  %v292 = vpack.c.b16 %v248, %v248
  %v293 = vpack.c.b16 %v249, %v249
  %v402 = vunpack.c.l.b16 %v56
  %v403 = vunpack.c.l.b16 %v57
  %v404 = vunpack.c.l.b16 %v58
  %v405 = vunpack.c.l.b16 %v59
  %v406 = vunpack.c.l.b16 %v60
  %v407 = vunpack.c.l.b16 %v61
  %v408 = vunpack.c.l.b16 %v62
  %v409 = vunpack.c.l.b16 %v63
  %v410 = vunpack.c.l.b16 %v64
  %v411 = vunpack.c.l.b16 %v65
  %v412 = vunpack.c.l.b16 %v66
  %v413 = vunpack.c.l.b16 %v67
  %v414 = vunpack.c.l.b16 %v68
  %v415 = vunpack.c.l.b16 %v69
  %v416 = vunpack.c.l.b16 %v70
  %v417 = vunpack.c.l.b16 %v71
  %v418 = vunpack.c.l.b16 %v72
  %v419 = vunpack.c.l.b16 %v73
  %v420 = vunpack.c.l.b16 %v74
  %v421 = vunpack.c.l.b16 %v75
  %v422 = vunpack.c.l.b16 %v76
  %v423 = vunpack.c.l.b16 %v77
  %v424 = vunpack.c.l.b16 %v78
  %v425 = vunpack.c.l.b16 %v79
  %v426 = vunpack.c.l.b16 %v80
  %v427 = vunpack.c.l.b16 %v81
  %v428 = vunpack.c.l.b16 %v82
  %v429 = vunpack.c.l.b16 %v83
  %v430 = vunpack.c.l.b16 %v84
  %v431 = vunpack.c.l.b16 %v85
  %v432 = vunpack.c.l.b16 %v86
  %v433 = vunpack.c.l.b16 %v87
  %v434 = vunpack.c.l.b16 %v88
  %v435 = vunpack.c.l.b16 %v89
  %v436 = vunpack.c.l.b16 %v90
  %v437 = vunpack.c.l.b16 %v91
  %v438 = vunpack.c.l.b16 %v92
  %v439 = vunpack.c.l.b16 %v93
  %v440 = vunpack.c.l.b16 %v94
  %v441 = vunpack.c.l.b16 %v95
  %v442 = vunpack.c.l.b16 %v96
  %v443 = vunpack.c.l.b16 %v97
  %v444 = vunpack.c.l.b16 %v98
  %v445 = vunpack.c.l.b16 %v99
  %v446 = vunpack.c.l.b16 %v100
  %v447 = vunpack.c.l.b16 %v101
  %v448 = vunpack.c.l.b16 %v102
  %v449 = vunpack.c.l.b16 %v103
  %v450 = vunpack.c.l.b16 %v104
  %v451 = vunpack.c.l.b16 %v105
  %v452 = vunpack.c.l.b16 %v106
  %v453 = vunpack.c.l.b16 %v107
  %v454 = vunpack.c.l.b16 %v108
  %v455 = vunpack.c.l.b16 %v109
  %v456 = vunpack.c.l.b16 %v110
  %v457 = vunpack.c.l.b16 %v111
  %v458 = vunpack.c.l.b16 %v112
  %v459 = vunpack.c.l.b16 %v113
  %v460 = vunpack.c.l.b16 %v114
  %v461 = vunpack.c.l.b16 %v115
  %v462 = vunpack.c.l.b16 %v116
  %v463 = vunpack.c.l.b16 %v117
  %v464 = vunpack.c.l.b16 %v118
  %v465 = vunpack.c.l.b16 %v119
  %v466 = vpack.c.b16 %v403, %v402
  %v467 = vpack.c.b16 %v405, %v404
  %v468 = vpack.c.b16 %v407, %v406
  %v469 = vpack.c.b16 %v409, %v408
  %v470 = vpack.c.b16 %v411, %v410
  %v471 = vpack.c.b16 %v413, %v412
  %v472 = vpack.c.b16 %v415, %v414
  %v473 = vpack.c.b16 %v417, %v416
  %v474 = vpack.c.b16 %v419, %v418
  %v475 = vpack.c.b16 %v421, %v420
  %v476 = vpack.c.b16 %v423, %v422
  %v477 = vpack.c.b16 %v425, %v424
  %v478 = vpack.c.b16 %v427, %v426
  %v479 = vpack.c.b16 %v429, %v428
  %v480 = vpack.c.b16 %v431, %v430
  %v481 = vpack.c.b16 %v433, %v432
  %v482 = vpack.c.b16 %v435, %v434
  %v483 = vpack.c.b16 %v437, %v436
  %v484 = vpack.c.b16 %v439, %v438
  %v485 = vpack.c.b16 %v441, %v440
  %v486 = vpack.c.b16 %v443, %v442
  %v487 = vpack.c.b16 %v445, %v444
  %v488 = vpack.c.b16 %v447, %v446
  %v489 = vpack.c.b16 %v449, %v448
  %v490 = vpack.c.b16 %v451, %v450
  %v491 = vpack.c.b16 %v453, %v452
  %v492 = vpack.c.b16 %v455, %v454
  %v493 = vpack.c.b16 %v457, %v456
  %v494 = vpack.c.b16 %v459, %v458
  %v495 = vpack.c.b16 %v461, %v460
  %v496 = vpack.c.b16 %v463, %v462
  %v497 = vpack.c.b16 %v465, %v464
  %530 = vmatpush.bf16.msra.mxu0 %v473
  %531 = vmatpush.bf16.msra.mxu0 %v472
  %532 = vmatpush.bf16.msra.mxu0 %v471
  %533 = vmatpush.bf16.msra.mxu0 %v470
  %534 = vmatpush.bf16.msra.mxu0 %v469
  %535 = vmatpush.bf16.msra.mxu0 %v468
  %536 = vmatpush.bf16.msra.mxu0 %v467
  %537 = vmatpush.bf16.msra.mxu0 %v466
  %538 = vmatmul.bf16.gmra.mxu0 %v250
  %v539 = vpop.f32.mrf.mxu0
  %v540 = vadd.f32 %v122, %v539
  %v541 = vpop.f32.mrf.mxu0
  %v542 = vadd.f32 %v122, %v541
  %543 = vmatmul.bf16.gmra.mxu0 %v254
  %v544 = vpop.f32.mrf.mxu0
  %v545 = vadd.f32 %v122, %v544
  %v546 = vpop.f32.mrf.mxu0
  %v547 = vadd.f32 %v122, %v546
  %548 = vmatmul.bf16.gmra.mxu0 %v258
  %v549 = vpop.f32.mrf.mxu0
  %v550 = vadd.f32 %v122, %v549
  %v551 = vpop.f32.mrf.mxu0
  %v552 = vadd.f32 %v122, %v551
  %553 = vmatmul.bf16.gmra.mxu0 %v262
  %v554 = vpop.f32.mrf.mxu0
  %v555 = vadd.f32 %v122, %v554
  %v556 = vpop.f32.mrf.mxu0
  %v557 = vadd.f32 %v122, %v556
  %558 = vmatmul.bf16.gmra.mxu0 %v266
  %v559 = vpop.f32.mrf.mxu0
  %v560 = vadd.f32 %v122, %v559
  %v561 = vpop.f32.mrf.mxu0
  %v562 = vadd.f32 %v122, %v561
  %563 = vmatmul.bf16.gmra.mxu0 %v270
  %v564 = vpop.f32.mrf.mxu0
  %v565 = vadd.f32 %v122, %v564
  %v566 = vpop.f32.mrf.mxu0
  %v567 = vadd.f32 %v122, %v566
  %568 = vmatmul.bf16.gmra.mxu0 %v274
  %v569 = vpop.f32.mrf.mxu0
  %v570 = vadd.f32 %v122, %v569
  %v571 = vpop.f32.mrf.mxu0
  %v572 = vadd.f32 %v122, %v571
  %573 = vmatmul.bf16.gmra.mxu0 %v278
  %v574 = vpop.f32.mrf.mxu0
  %v575 = vadd.f32 %v122, %v574
  %v576 = vpop.f32.mrf.mxu0
  %v577 = vadd.f32 %v122, %v576
  %578 = vmatmul.bf16.gmra.mxu0 %v282
  %v579 = vpop.f32.mrf.mxu0
  %v580 = vadd.f32 %v122, %v579
  %v581 = vpop.f32.mrf.mxu0
  %v582 = vadd.f32 %v122, %v581
  %583 = vmatmul.bf16.gmra.mxu0 %v286
  %v584 = vpop.f32.mrf.mxu0
  %v585 = vadd.f32 %v122, %v584
  %v586 = vpop.f32.mrf.mxu0
  %v587 = vadd.f32 %v122, %v586
  %588 = vmatmul.bf16.gmra.mxu0 %v290
  %v589 = vpop.f32.mrf.mxu0
  %v590 = vadd.f32 %v122, %v589
  %v591 = vpop.f32.mrf.mxu0
  %592 = vdwg.mxu0
  %593 = vmatpush.bf16.msra.mxu0 %v481
  %594 = vmatpush.bf16.msra.mxu0 %v480
  %595 = vmatpush.bf16.msra.mxu0 %v479
  %596 = vmatpush.bf16.msra.mxu0 %v478
  %597 = vmatpush.bf16.msra.mxu0 %v477
  %598 = vmatpush.bf16.msra.mxu0 %v476
  %599 = vmatpush.bf16.msra.mxu0 %v475
  %600 = vmatpush.bf16.msra.mxu0 %v474
  %601 = vmatmul.bf16.gmra.mxu0 %v251
  %v602 = vpop.f32.mrf.mxu0
  %v603 = vadd.f32 %v540, %v602
  %v604 = vpop.f32.mrf.mxu0
  %v605 = vadd.f32 %v542, %v604
  %606 = vmatmul.bf16.gmra.mxu0 %v255
  %v607 = vpop.f32.mrf.mxu0
  %v608 = vadd.f32 %v545, %v607
  %v609 = vpop.f32.mrf.mxu0
  %v610 = vadd.f32 %v547, %v609
  %611 = vmatmul.bf16.gmra.mxu0 %v259
  %v612 = vpop.f32.mrf.mxu0
  %v613 = vadd.f32 %v550, %v612
  %v614 = vpop.f32.mrf.mxu0
  %v615 = vadd.f32 %v552, %v614
  %616 = vmatmul.bf16.gmra.mxu0 %v263
  %v617 = vpop.f32.mrf.mxu0
  %v618 = vadd.f32 %v555, %v617
  %v619 = vpop.f32.mrf.mxu0
  %v620 = vadd.f32 %v557, %v619
  %621 = vmatmul.bf16.gmra.mxu0 %v267
  %v622 = vpop.f32.mrf.mxu0
  %v623 = vadd.f32 %v560, %v622
  %v624 = vpop.f32.mrf.mxu0
  %v625 = vadd.f32 %v562, %v624
  %626 = vmatmul.bf16.gmra.mxu0 %v271
  %v627 = vpop.f32.mrf.mxu0
  %v628 = vadd.f32 %v565, %v627
  %v629 = vpop.f32.mrf.mxu0
  %v630 = vadd.f32 %v567, %v629
  %631 = vmatmul.bf16.gmra.mxu0 %v275
  %v632 = vpop.f32.mrf.mxu0
  %v633 = vadd.f32 %v570, %v632
  %v634 = vpop.f32.mrf.mxu0
  %v635 = vadd.f32 %v572, %v634
  %636 = vmatmul.bf16.gmra.mxu0 %v279
  %v637 = vpop.f32.mrf.mxu0
  %v638 = vadd.f32 %v575, %v637
  %v639 = vpop.f32.mrf.mxu0
  %v640 = vadd.f32 %v577, %v639
  %641 = vmatmul.bf16.gmra.mxu0 %v283
  %v642 = vpop.f32.mrf.mxu0
  %v643 = vadd.f32 %v580, %v642
  %v644 = vpop.f32.mrf.mxu0
  %v645 = vadd.f32 %v582, %v644
  %646 = vmatmul.bf16.gmra.mxu0 %v287
  %v647 = vpop.f32.mrf.mxu0
  %v648 = vadd.f32 %v585, %v647
  %v649 = vpop.f32.mrf.mxu0
  %v650 = vadd.f32 %v587, %v649
  %651 = vmatmul.bf16.gmra.mxu0 %v291
  %v652 = vpop.f32.mrf.mxu0
  %v653 = vadd.f32 %v590, %v652
  %v654 = vpop.f32.mrf.mxu0
  %655 = vdwg.mxu0
  %656 = vmatpush.bf16.msra.mxu0 %v489
  %657 = vmatpush.bf16.msra.mxu0 %v488
  %658 = vmatpush.bf16.msra.mxu0 %v487
  %659 = vmatpush.bf16.msra.mxu0 %v486
  %660 = vmatpush.bf16.msra.mxu0 %v485
  %661 = vmatpush.bf16.msra.mxu0 %v484
  %662 = vmatpush.bf16.msra.mxu0 %v483
  %663 = vmatpush.bf16.msra.mxu0 %v482
  %664 = vmatmul.bf16.gmra.mxu0 %v252
  %v665 = vpop.f32.mrf.mxu0
  %v666 = vadd.f32 %v603, %v665
  %v667 = vpop.f32.mrf.mxu0
  %v668 = vadd.f32 %v605, %v667
  %669 = vmatmul.bf16.gmra.mxu0 %v256
  %v670 = vpop.f32.mrf.mxu0
  %v671 = vadd.f32 %v608, %v670
  %v672 = vpop.f32.mrf.mxu0
  %v673 = vadd.f32 %v610, %v672
  %674 = vmatmul.bf16.gmra.mxu0 %v260
  %v675 = vpop.f32.mrf.mxu0
  %v676 = vadd.f32 %v613, %v675
  %v677 = vpop.f32.mrf.mxu0
  %v678 = vadd.f32 %v615, %v677
  %679 = vmatmul.bf16.gmra.mxu0 %v264
  %v680 = vpop.f32.mrf.mxu0
  %v681 = vadd.f32 %v618, %v680
  %v682 = vpop.f32.mrf.mxu0
  %v683 = vadd.f32 %v620, %v682
  %684 = vmatmul.bf16.gmra.mxu0 %v268
  %v685 = vpop.f32.mrf.mxu0
  %v686 = vadd.f32 %v623, %v685
  %v687 = vpop.f32.mrf.mxu0
  %v688 = vadd.f32 %v625, %v687
  %689 = vmatmul.bf16.gmra.mxu0 %v272
  %v690 = vpop.f32.mrf.mxu0
  %v691 = vadd.f32 %v628, %v690
  %v692 = vpop.f32.mrf.mxu0
  %v693 = vadd.f32 %v630, %v692
  %694 = vmatmul.bf16.gmra.mxu0 %v276
  %v695 = vpop.f32.mrf.mxu0
  %v696 = vadd.f32 %v633, %v695
  %v697 = vpop.f32.mrf.mxu0
  %v698 = vadd.f32 %v635, %v697
  %699 = vmatmul.bf16.gmra.mxu0 %v280
  %v700 = vpop.f32.mrf.mxu0
  %v701 = vadd.f32 %v638, %v700
  %v702 = vpop.f32.mrf.mxu0
  %v703 = vadd.f32 %v640, %v702
  %704 = vmatmul.bf16.gmra.mxu0 %v284
  %v705 = vpop.f32.mrf.mxu0
  %v706 = vadd.f32 %v643, %v705
  %v707 = vpop.f32.mrf.mxu0
  %v708 = vadd.f32 %v645, %v707
  %709 = vmatmul.bf16.gmra.mxu0 %v288
  %v710 = vpop.f32.mrf.mxu0
  %v711 = vadd.f32 %v648, %v710
  %v712 = vpop.f32.mrf.mxu0
  %v713 = vadd.f32 %v650, %v712
  %714 = vmatmul.bf16.gmra.mxu0 %v292
  %v715 = vpop.f32.mrf.mxu0
  %v716 = vadd.f32 %v653, %v715
  %v717 = vpop.f32.mrf.mxu0
  %718 = vdwg.mxu0
  %719 = vmatpush.bf16.msra.mxu0 %v497
  %720 = vmatpush.bf16.msra.mxu0 %v496
  %721 = vmatpush.bf16.msra.mxu0 %v495
  %722 = vmatpush.bf16.msra.mxu0 %v494
  %723 = vmatpush.bf16.msra.mxu0 %v493
  %724 = vmatpush.bf16.msra.mxu0 %v492
  %725 = vmatpush.bf16.msra.mxu0 %v491
  %726 = vmatpush.bf16.msra.mxu0 %v490
  %727 = vmatmul.bf16.gmra.mxu0 %v253
  %v728 = vpop.f32.mrf.mxu0
  %v729 = vadd.f32 %v666, %v728
  %v730 = vpop.f32.mrf.mxu0
  %v731 = vadd.f32 %v668, %v730
  %732 = vmatmul.bf16.gmra.mxu0 %v257
  %v733 = vpop.f32.mrf.mxu0
  %v734 = vadd.f32 %v671, %v733
  %v735 = vpop.f32.mrf.mxu0
  %v736 = vadd.f32 %v673, %v735
  %737 = vmatmul.bf16.gmra.mxu0 %v261
  %v738 = vpop.f32.mrf.mxu0
  %v739 = vadd.f32 %v676, %v738
  %v740 = vpop.f32.mrf.mxu0
  %v741 = vadd.f32 %v678, %v740
  %742 = vmatmul.bf16.gmra.mxu0 %v265
  %v743 = vpop.f32.mrf.mxu0
  %v744 = vadd.f32 %v681, %v743
  %v745 = vpop.f32.mrf.mxu0
  %v746 = vadd.f32 %v683, %v745
  %747 = vmatmul.bf16.gmra.mxu0 %v269
  %v748 = vpop.f32.mrf.mxu0
  %v749 = vadd.f32 %v686, %v748
  %v750 = vpop.f32.mrf.mxu0
  %v751 = vadd.f32 %v688, %v750
  %752 = vmatmul.bf16.gmra.mxu0 %v273
  %v753 = vpop.f32.mrf.mxu0
  %v754 = vadd.f32 %v691, %v753
  %v755 = vpop.f32.mrf.mxu0
  %v756 = vadd.f32 %v693, %v755
  %757 = vmatmul.bf16.gmra.mxu0 %v277
  %v758 = vpop.f32.mrf.mxu0
  %v759 = vadd.f32 %v696, %v758
  %v760 = vpop.f32.mrf.mxu0
  %v761 = vadd.f32 %v698, %v760
  %762 = vmatmul.bf16.gmra.mxu0 %v281
  %v763 = vpop.f32.mrf.mxu0
  %v764 = vadd.f32 %v701, %v763
  %v765 = vpop.f32.mrf.mxu0
  %v766 = vadd.f32 %v703, %v765
  %767 = vmatmul.bf16.gmra.mxu0 %v285
  %v768 = vpop.f32.mrf.mxu0
  %v769 = vadd.f32 %v706, %v768
  %v770 = vpop.f32.mrf.mxu0
  %v771 = vadd.f32 %v708, %v770
  %772 = vmatmul.bf16.gmra.mxu0 %v289
  %v773 = vpop.f32.mrf.mxu0
  %v774 = vadd.f32 %v711, %v773
  %v775 = vpop.f32.mrf.mxu0
  %v776 = vadd.f32 %v713, %v775
  %777 = vmatmul.bf16.gmra.mxu0 %v293
  %v778 = vpop.f32.mrf.mxu0
  %v779 = vadd.f32 %v716, %v778
  %v780 = vpop.f32.mrf.mxu0
  %781 = vdwg.mxu0
  %v782 = vmax.f32 %v729, 0.0
  %v783 = vmax.f32 %v731, 0.0
  %v784 = vmax.f32 %v734, 0.0
  %v785 = vmax.f32 %v736, 0.0
  %v786 = vmax.f32 %v739, 0.0
  %v787 = vmax.f32 %v741, 0.0
  %v788 = vmax.f32 %v744, 0.0
  %v789 = vmax.f32 %v746, 0.0
  %v790 = vmax.f32 %v749, 0.0
  %v791 = vmax.f32 %v751, 0.0
  %v792 = vmax.f32 %v754, 0.0
  %v793 = vmax.f32 %v756, 0.0
  %v794 = vmax.f32 %v759, 0.0
  %v795 = vmax.f32 %v761, 0.0
  %v796 = vmax.f32 %v764, 0.0
  %v797 = vmax.f32 %v766, 0.0
  %v798 = vmax.f32 %v769, 0.0
  %v799 = vmax.f32 %v771, 0.0
  %v800 = vmax.f32 %v774, 0.0
  %v801 = vmax.f32 %v776, 0.0
  %v802 = vmax.f32 %v779, 0.0
  %v803 = vpack.c.bf16 %v782, %v782
  %v804 = vpack.c.bf16 %v783, %v783
  %v805 = vpack.c.bf16 %v784, %v784
  %v806 = vpack.c.bf16 %v785, %v785
  %v807 = vpack.c.bf16 %v786, %v786
  %v808 = vpack.c.bf16 %v787, %v787
  %v809 = vpack.c.bf16 %v788, %v788
  %v810 = vpack.c.bf16 %v789, %v789
  %v811 = vpack.c.bf16 %v790, %v790
  %v812 = vpack.c.bf16 %v791, %v791
  %v813 = vpack.c.bf16 %v792, %v792
  %v814 = vpack.c.bf16 %v793, %v793
  %v815 = vpack.c.bf16 %v794, %v794
  %v816 = vpack.c.bf16 %v795, %v795
  %v817 = vpack.c.bf16 %v796, %v796
  %v818 = vpack.c.bf16 %v797, %v797
  %v819 = vpack.c.bf16 %v798, %v798
  %v820 = vpack.c.bf16 %v799, %v799
  %v821 = vpack.c.bf16 %v800, %v800
  %v822 = vpack.c.bf16 %v801, %v801
  %v823 = vpack.c.bf16 %v802, %v802
  %vm824 = vcmask 519168
  %825 = vst.msk [vmem:[%s3] sm:$0xf] %vm824, %v803
  %826 = vst.msk [vmem:[%s3 + $0x4] sm:$0xf] %vm824, %v804
  %827 = vst.msk [vmem:[%s3 + $0x8] sm:$0xf] %vm824, %v805
  %828 = vst.msk [vmem:[%s3 + $0xc] sm:$0xf] %vm824, %v806
  %829 = vst.msk [vmem:[%s3 + $0x10] sm:$0xf] %vm824, %v807
  %830 = vst.msk [vmem:[%s3 + $0x14] sm:$0xf] %vm824, %v808
  %831 = vst.msk [vmem:[%s3 + $0x18] sm:$0xf] %vm824, %v809
  %832 = vst.msk [vmem:[%s3 + $0x1c] sm:$0xf] %vm824, %v810
  %833 = vst.msk [vmem:[%s3 + $0x20] sm:$0xf] %vm824, %v811
  %834 = vst.msk [vmem:[%s3 + $0x24] sm:$0xf] %vm824, %v812
  %835 = vst.msk [vmem:[%s3 + $0x28] sm:$0xf] %vm824, %v813
  %836 = vst.msk [vmem:[%s3 + $0x2c] sm:$0xf] %vm824, %v814
  %837 = vst.msk [vmem:[%s3 + $0x30] sm:$0xf] %vm824, %v815
  %838 = vst.msk [vmem:[%s3 + $0x34] sm:$0xf] %vm824, %v816
  %839 = vst.msk [vmem:[%s3 + $0x38] sm:$0xf] %vm824, %v817
  %840 = vst.msk [vmem:[%s3 + $0x3c] sm:$0xf] %vm824, %v818
  %841 = vst.msk [vmem:[%s3 + $0x40] sm:$0xf] %vm824, %v819
  %842 = vst.msk [vmem:[%s3 + $0x44] sm:$0xf] %vm824, %v820
  %843 = vst.msk [vmem:[%s3 + $0x48] sm:$0xf] %vm824, %v821
  %844 = vst.msk [vmem:[%s3 + $0x4c] sm:$0xf] %vm824, %v822
  %vm845 = vcmask 516096
  %846 = vst.msk [vmem:[%s3 + $0x50] sm:$0x1] %vm845, %v823
  // Predicated region
  $region14: #{dqn_forward.4} parent=0 // pred_check
    _
  $region15: #{dqn_forward.4} parent=0 // pred_check_branch
    %848 = sbr.rel (0) target = $region17
  $region16: #{dqn_forward.4} parent=0 // pred_region
    _
  $region17: #{dqn_forward.4} parent=0 // pred_fallthru
    _
  // Predicated region
  $region18: #{dqn_forward.4} parent=0 // pred_check
    _
  $region19: #{dqn_forward.4} parent=0 // pred_check_branch
    %850 = sbr.rel (0) target = $region21
  $region20: #{dqn_forward.4} parent=0 // pred_region
    _
  $region21: #{dqn_forward.4} parent=0 // pred_fallthru
    _

// kernel: dqn_forward.5
$region0: #{dqn_forward.5}
  #allocation0 [shape = 'u32[]', space=smem, size = 0x4, offset = 0x4, fixed_abs, tag = 'smem constant byte address 0x4 - core index']
  #allocation1 [shape = 'u32[72,128]{1,0:T(1,128)}', space=vmem, size = 0x9000, scoped, tag = 'internal scratch']
  %s0 = inlined_call_operand.vmem [shape: bf16[49,2,576], index: 0, kind: input, shape index: {}]
  %s1 = inlined_call_operand.vmem [shape: bf16[576,64], index: 1, kind: input, shape index: {}]
  %s2 = inlined_call_operand.vmem [shape: f32[1,64], index: 2, kind: input, shape index: {}]
  %s3 = inlined_call_operand.vmem [shape: bf16[49,64,512], index: 3, kind: input, shape index: {}]
  %s4 = inlined_call_operand.vmem [shape: f32[1,512], index: 4, kind: input, shape index: {}]
  %s5 = inlined_call_operand.vmem [shape: bf16[512,128], index: 5, kind: input, shape index: {}]
  %s6 = inlined_call_operand.vmem [shape: f32[1,128], index: 6, kind: input, shape index: {}]
  %s7 = inlined_call_operand.hbm [shape: f32[2,128], index: 7, kind: output, shape index: {}]
  %s8 = sld [smem:[#allocation0]]
  $region45: #{dqn_forward.5} parent=0
    _
  %s10 = ssub.s32 1, %s8
  %s11 = scalar_select 0, %s10, %s8
  $region1: #{dqn_forward.5} parent=0
    #allocation2 [shape = 'u8[1024]{0}', space=vmem, size = 0x400, scoped, tag = 'output window, operand 0, single buffered']
    #allocation3 [shape = 's32[1]{0}', space=sflag, size = 0x4, scoped, tag = 'scoped memory for dqn_forward.5']
    %12 = vsyncpa [#allocation3], 0
    // Predicated region
    $region2: #{dqn_forward.5} parent=1 // pred_check
      _
    $region3: #{dqn_forward.5} parent=1 // pred_check_branch
      %14 = sbr.rel (0) target = $region5
    $region4: #{dqn_forward.5} parent=1 // pred_region
      _
    $region5: #{dqn_forward.5} parent=1 // pred_fallthru
      _
    // Predicated region
    $region6: #{dqn_forward.5} parent=1 // pred_check
      _
    $region7: #{dqn_forward.5} parent=1 // pred_check_branch
      %16 = sbr.rel (0) target = $region9
    $region8: #{dqn_forward.5} parent=1 // pred_region
      _
    $region9: #{dqn_forward.5} parent=1 // pred_fallthru
      _
    // Predicated region
    $region10: #{dqn_forward.5} parent=1 // pred_check
      _
    $region11: #{dqn_forward.5} parent=1 // pred_check_branch
      %18 = sbr.rel (0) target = $region13
    $region12: #{dqn_forward.5} parent=1 // pred_region
      _
    $region13: #{dqn_forward.5} parent=1 // pred_fallthru
      _
    // Predicated region
    $region14: #{dqn_forward.5} parent=1 // pred_check
      _
    $region15: #{dqn_forward.5} parent=1 // pred_check_branch
      %20 = sbr.rel (0) target = $region17
    $region16: #{dqn_forward.5} parent=1 // pred_region
      _
    $region17: #{dqn_forward.5} parent=1 // pred_fallthru
      _
    // Predicated region
    $region18: #{dqn_forward.5} parent=1 // pred_check
      _
    $region19: #{dqn_forward.5} parent=1 // pred_check_branch
      %22 = sbr.rel (0) target = $region21
    $region20: #{dqn_forward.5} parent=1 // pred_region
      _
    $region21: #{dqn_forward.5} parent=1 // pred_fallthru
      _
    // Predicated region
    $region22: #{dqn_forward.5} parent=1 // pred_check
      _
    $region23: #{dqn_forward.5} parent=1 // pred_check_branch
      %24 = sbr.rel (0) target = $region25
    $region24: #{dqn_forward.5} parent=1 // pred_region
      _
    $region25: #{dqn_forward.5} parent=1 // pred_fallthru
      _
    // Predicated region
    $region26: #{dqn_forward.5} parent=1 // pred_check
      _
    $region27: #{dqn_forward.5} parent=1 // pred_check_branch
      %26 = sbr.rel (0) target = $region29
    $region28: #{dqn_forward.5} parent=1 // pred_region
      _
    $region29: #{dqn_forward.5} parent=1 // pred_fallthru
      _
    loop: start=0, step=1, limit=49
    $region30: #{dqn_forward.5} parent=1 // loop_pre_header
      _
    $region31: #{dqn_forward.5} parent=1 // loop_header
      %s29 = sphi 0, %s33
      %p30 = scmp.ge.s32.totalorder %s29, 49
      %v34 = vphi 0.0, %v568
      %v35 = vphi 0.0, %v569
      %v36 = vphi 0.0, %v570
      %v37 = vphi 0.0, %v571
    $region32: #{dqn_forward.5} parent=1 // loop_header_branch
      %32 = sbr.rel (%p30) target = $region36
    $region33: #{dqn_forward.5} parent=1 // loop_body
      %s38 = smul.u32 %s29, 5
      %s39 = scalar_lea.vmem %s0, %s38
      %v40 = vld [vmem:[%s39] sm:$0x1f]
      %v41 = vld [vmem:[%s1] sm:$0xf]
      %v42 = vld [vmem:[%s1 + $0x4] sm:$0xf]
      %v43 = vld [vmem:[%s1 + $0x8] sm:$0xf]
      %v44 = vld [vmem:[%s1 + $0xc] sm:$0xf]
      %v45 = vld [vmem:[%s1 + $0x10] sm:$0xf]
      %v46 = vld [vmem:[%s1 + $0x14] sm:$0xf]
      %v47 = vld [vmem:[%s1 + $0x18] sm:$0xf]
      %v48 = vld [vmem:[%s1 + $0x1c] sm:$0xf]
      %v49 = vld [vmem:[%s1 + $0x20] sm:$0xf]
      %v50 = vld [vmem:[%s1 + $0x24] sm:$0xf]
      %v51 = vld [vmem:[%s1 + $0x28] sm:$0xf]
      %v52 = vld [vmem:[%s1 + $0x2c] sm:$0xf]
      %v53 = vld [vmem:[%s1 + $0x30] sm:$0xf]
      %v54 = vld [vmem:[%s1 + $0x34] sm:$0xf]
      %v55 = vld [vmem:[%s1 + $0x38] sm:$0xf]
      %v56 = vld [vmem:[%s1 + $0x3c] sm:$0xf]
      %v57 = vld [vmem:[%s1 + $0x40] sm:$0xf]
      %v58 = vld [vmem:[%s1 + $0x44] sm:$0xf]
      %v59 = vld [vmem:[%s1 + $0x48] sm:$0xf]
      %v60 = vld [vmem:[%s1 + $0x4c] sm:$0xf]
      %v61 = vld [vmem:[%s1 + $0x50] sm:$0xf]
      %v62 = vld [vmem:[%s1 + $0x54] sm:$0xf]
      %v63 = vld [vmem:[%s1 + $0x58] sm:$0xf]
      %v64 = vld [vmem:[%s1 + $0x5c] sm:$0xf]
      %v65 = vld [vmem:[%s1 + $0x60] sm:$0xf]
      %v66 = vld [vmem:[%s1 + $0x64] sm:$0xf]
      %v67 = vld [vmem:[%s1 + $0x68] sm:$0xf]
      %v68 = vld [vmem:[%s1 + $0x6c] sm:$0xf]
      %v69 = vld [vmem:[%s1 + $0x70] sm:$0xf]
      %v70 = vld [vmem:[%s1 + $0x74] sm:$0xf]
      %v71 = vld [vmem:[%s1 + $0x78] sm:$0xf]
      %v72 = vld [vmem:[%s1 + $0x7c] sm:$0xf]
      %v73 = vld [vmem:[%s1 + $0x80] sm:$0xf]
      %v74 = vld [vmem:[%s1 + $0x84] sm:$0xf]
      %v75 = vld [vmem:[%s1 + $0x88] sm:$0xf]
      %v76 = vld [vmem:[%s1 + $0x8c] sm:$0xf]
      %v77 = vld [vmem:[%s1 + $0x90] sm:$0xf]
      %v78 = vld [vmem:[%s1 + $0x94] sm:$0xf]
      %v79 = vld [vmem:[%s1 + $0x98] sm:$0xf]
      %v80 = vld [vmem:[%s1 + $0x9c] sm:$0xf]
      %v81 = vld [vmem:[%s1 + $0xa0] sm:$0xf]
      %v82 = vld [vmem:[%s1 + $0xa4] sm:$0xf]
      %v83 = vld [vmem:[%s1 + $0xa8] sm:$0xf]
      %v84 = vld [vmem:[%s1 + $0xac] sm:$0xf]
      %v85 = vld [vmem:[%s1 + $0xb0] sm:$0xf]
      %v86 = vld [vmem:[%s1 + $0xb4] sm:$0xf]
      %v87 = vld [vmem:[%s1 + $0xb8] sm:$0xf]
      %v88 = vld [vmem:[%s1 + $0xbc] sm:$0xf]
      %v89 = vld [vmem:[%s1 + $0xc0] sm:$0xf]
      %v90 = vld [vmem:[%s1 + $0xc4] sm:$0xf]
      %v91 = vld [vmem:[%s1 + $0xc8] sm:$0xf]
      %v92 = vld [vmem:[%s1 + $0xcc] sm:$0xf]
      %v93 = vld [vmem:[%s1 + $0xd0] sm:$0xf]
      %v94 = vld [vmem:[%s1 + $0xd4] sm:$0xf]
      %v95 = vld [vmem:[%s1 + $0xd8] sm:$0xf]
      %v96 = vld [vmem:[%s1 + $0xdc] sm:$0xf]
      %v97 = vld [vmem:[%s1 + $0xe0] sm:$0xf]
      %v98 = vld [vmem:[%s1 + $0xe4] sm:$0xf]
      %v99 = vld [vmem:[%s1 + $0xe8] sm:$0xf]
      %v100 = vld [vmem:[%s1 + $0xec] sm:$0xf]
      %v101 = vld [vmem:[%s1 + $0xf0] sm:$0xf]
      %v102 = vld [vmem:[%s1 + $0xf4] sm:$0xf]
      %v103 = vld [vmem:[%s1 + $0xf8] sm:$0xf]
      %v104 = vld [vmem:[%s1 + $0xfc] sm:$0xf]
      %v105 = vld [vmem:[%s1 + $0x100] sm:$0xf]
      %v106 = vld [vmem:[%s1 + $0x104] sm:$0xf]
      %v107 = vld [vmem:[%s1 + $0x108] sm:$0xf]
      %v108 = vld [vmem:[%s1 + $0x10c] sm:$0xf]
      %v109 = vld [vmem:[%s1 + $0x110] sm:$0xf]
      %v110 = vld [vmem:[%s1 + $0x114] sm:$0xf]
      %v111 = vld [vmem:[%s1 + $0x118] sm:$0xf]
      %v112 = vld [vmem:[%s1 + $0x11c] sm:$0xf]
      %v113 = vld [vmem:[%s2] sm:$0x1]
      %v115 = vperm.slane %v113, 0
      %118 = vst [vmem:[#allocation1] ss:$9 sm:$0xff] %v40
      %v119 = vld [vmem:[#allocation1] sm:$0xff]
      %v120 = vld [vmem:[#allocation1 + $0x9] sm:$0xff]
      %v121 = vld [vmem:[#allocation1 + $0x12] sm:$0xff]
      %v122 = vld [vmem:[#allocation1 + $0x1b] sm:$0xff]
      %v123 = vld [vmem:[#allocation1 + $0x24] sm:$0xff]
      %v200 = vunpack.c.l.b16 %v41
      %v201 = vunpack.c.l.b16 %v42
      %v202 = vunpack.c.l.b16 %v43
      %v203 = vunpack.c.l.b16 %v44
      %v204 = vunpack.c.l.b16 %v45
      %v205 = vunpack.c.l.b16 %v46
      %v206 = vunpack.c.l.b16 %v47
      %v207 = vunpack.c.l.b16 %v48
      %v208 = vunpack.c.l.b16 %v49
      %v209 = vunpack.c.l.b16 %v50
      %v210 = vunpack.c.l.b16 %v51
      %v211 = vunpack.c.l.b16 %v52
      %v212 = vunpack.c.l.b16 %v53
      %v213 = vunpack.c.l.b16 %v54
      %v214 = vunpack.c.l.b16 %v55
      %v215 = vunpack.c.l.b16 %v56
      %v216 = vunpack.c.l.b16 %v57
      %v217 = vunpack.c.l.b16 %v58
      %v218 = vunpack.c.l.b16 %v59
      %v219 = vunpack.c.l.b16 %v60
      %v220 = vunpack.c.l.b16 %v61
      %v221 = vunpack.c.l.b16 %v62
      %v222 = vunpack.c.l.b16 %v63
      %v223 = vunpack.c.l.b16 %v64
      %v224 = vunpack.c.l.b16 %v65
      %v225 = vunpack.c.l.b16 %v66
      %v226 = vunpack.c.l.b16 %v67
      %v227 = vunpack.c.l.b16 %v68
      %v228 = vunpack.c.l.b16 %v69
      %v229 = vunpack.c.l.b16 %v70
      %v230 = vunpack.c.l.b16 %v71
      %v231 = vunpack.c.l.b16 %v72
      %v232 = vunpack.c.l.b16 %v73
      %v233 = vunpack.c.l.b16 %v74
      %v234 = vunpack.c.l.b16 %v75
      %v235 = vunpack.c.l.b16 %v76
      %v236 = vunpack.c.l.b16 %v77
      %v237 = vunpack.c.l.b16 %v78
      %v238 = vunpack.c.l.b16 %v79
      %v239 = vunpack.c.l.b16 %v80
      %v240 = vunpack.c.l.b16 %v81
      %v241 = vunpack.c.l.b16 %v82
      %v242 = vunpack.c.l.b16 %v83
      %v243 = vunpack.c.l.b16 %v84
      %v244 = vunpack.c.l.b16 %v85
      %v245 = vunpack.c.l.b16 %v86
      %v246 = vunpack.c.l.b16 %v87
      %v247 = vunpack.c.l.b16 %v88
      %v248 = vunpack.c.l.b16 %v89
      %v249 = vunpack.c.l.b16 %v90
      %v250 = vunpack.c.l.b16 %v91
      %v251 = vunpack.c.l.b16 %v92
      %v252 = vunpack.c.l.b16 %v93
      %v253 = vunpack.c.l.b16 %v94
      %v254 = vunpack.c.l.b16 %v95
      %v255 = vunpack.c.l.b16 %v96
      %v256 = vunpack.c.l.b16 %v97
      %v257 = vunpack.c.l.b16 %v98
      %v258 = vunpack.c.l.b16 %v99
      %v259 = vunpack.c.l.b16 %v100
      %v260 = vunpack.c.l.b16 %v101
      %v261 = vunpack.c.l.b16 %v102
      %v262 = vunpack.c.l.b16 %v103
      %v263 = vunpack.c.l.b16 %v104
      %v264 = vunpack.c.l.b16 %v105
      %v265 = vunpack.c.l.b16 %v106
      %v266 = vunpack.c.l.b16 %v107
      %v267 = vunpack.c.l.b16 %v108
      %v268 = vunpack.c.l.b16 %v109
      %v269 = vunpack.c.l.b16 %v110
      %v270 = vunpack.c.l.b16 %v111
      %v271 = vunpack.c.l.b16 %v112
      %v272 = vpack.c.b16 %v201, %v200
      %v273 = vpack.c.b16 %v203, %v202
      %v274 = vpack.c.b16 %v205, %v204
      %v275 = vpack.c.b16 %v207, %v206
      %v276 = vpack.c.b16 %v209, %v208
      %v277 = vpack.c.b16 %v211, %v210
      %v278 = vpack.c.b16 %v213, %v212
      %v279 = vpack.c.b16 %v215, %v214
      %v280 = vpack.c.b16 %v217, %v216
      %v281 = vpack.c.b16 %v219, %v218
      %v282 = vpack.c.b16 %v221, %v220
      %v283 = vpack.c.b16 %v223, %v222
      %v284 = vpack.c.b16 %v225, %v224
      %v285 = vpack.c.b16 %v227, %v226
      %v286 = vpack.c.b16 %v229, %v228
      %v287 = vpack.c.b16 %v231, %v230
      %v288 = vpack.c.b16 %v233, %v232
      %v289 = vpack.c.b16 %v235, %v234
      %v290 = vpack.c.b16 %v237, %v236
      %v291 = vpack.c.b16 %v239, %v238
      %v292 = vpack.c.b16 %v241, %v240
      %v293 = vpack.c.b16 %v243, %v242
      %v294 = vpack.c.b16 %v245, %v244
      %v295 = vpack.c.b16 %v247, %v246
      %v296 = vpack.c.b16 %v249, %v248
      %v297 = vpack.c.b16 %v251, %v250
      %v298 = vpack.c.b16 %v253, %v252
      %v299 = vpack.c.b16 %v255, %v254
      %v300 = vpack.c.b16 %v257, %v256
      %v301 = vpack.c.b16 %v259, %v258
      %v302 = vpack.c.b16 %v261, %v260
      %v303 = vpack.c.b16 %v263, %v262
      %v304 = vpack.c.b16 %v265, %v264
      %v305 = vpack.c.b16 %v267, %v266
      %v306 = vpack.c.b16 %v269, %v268
      %v307 = vpack.c.b16 %v271, %v270
      %vm344 = vcmask 523264
      %v345 = vsel %vm344, %v123, 0
      %347 = vmatpush.bf16.msra.mxu0 %v279
      %348 = vmatpush.bf16.msra.mxu0 %v278
      %349 = vmatpush.bf16.msra.mxu0 %v277
      %350 = vmatpush.bf16.msra.mxu0 %v276
      %351 = vmatpush.bf16.msra.mxu0 %v275
      %352 = vmatpush.bf16.msra.mxu0 %v274
      %353 = vmatpush.bf16.msra.mxu0 %v273
      %354 = vmatpush.bf16.msra.mxu0 %v272
      %355 = vmatmul.bf16.gmra.mxu0 %v119
      %v356 = vpop.f32.mrf.mxu0
      %v357 = vadd.f32 %v115, %v356
      %v358 = vpop.f32.mrf.mxu0
      %359 = vdwg.mxu0
      %360 = vmatpush.bf16.msra.mxu0 %v287
      %361 = vmatpush.bf16.msra.mxu0 %v286
      %362 = vmatpush.bf16.msra.mxu0 %v285
      %363 = vmatpush.bf16.msra.mxu0 %v284
      %364 = vmatpush.bf16.msra.mxu0 %v283
      %365 = vmatpush.bf16.msra.mxu0 %v282
      %366 = vmatpush.bf16.msra.mxu0 %v281
      %367 = vmatpush.bf16.msra.mxu0 %v280
      %368 = vmatmul.bf16.gmra.mxu0 %v120
      %v369 = vpop.f32.mrf.mxu0
      %v370 = vadd.f32 %v357, %v369
      %v371 = vpop.f32.mrf.mxu0
      %372 = vdwg.mxu0
      %373 = vmatpush.bf16.msra.mxu0 %v295
      %374 = vmatpush.bf16.msra.mxu0 %v294
      %375 = vmatpush.bf16.msra.mxu0 %v293
      %376 = vmatpush.bf16.msra.mxu0 %v292
      %377 = vmatpush.bf16.msra.mxu0 %v291
      %378 = vmatpush.bf16.msra.mxu0 %v290
      %379 = vmatpush.bf16.msra.mxu0 %v289
      %380 = vmatpush.bf16.msra.mxu0 %v288
      %381 = vmatmul.bf16.gmra.mxu0 %v121
      %v382 = vpop.f32.mrf.mxu0
      %v383 = vadd.f32 %v370, %v382
      %v384 = vpop.f32.mrf.mxu0
      %385 = vdwg.mxu0
      %386 = vmatpush.bf16.msra.mxu0 %v303
      %387 = vmatpush.bf16.msra.mxu0 %v302
      %388 = vmatpush.bf16.msra.mxu0 %v301
      %389 = vmatpush.bf16.msra.mxu0 %v300
      %390 = vmatpush.bf16.msra.mxu0 %v299
      %391 = vmatpush.bf16.msra.mxu0 %v298
      %392 = vmatpush.bf16.msra.mxu0 %v297
      %393 = vmatpush.bf16.msra.mxu0 %v296
      %394 = vmatmul.bf16.gmra.mxu0 %v122
      %v395 = vpop.f32.mrf.mxu0
      %v396 = vadd.f32 %v383, %v395
      %v397 = vpop.f32.mrf.mxu0
      %398 = vdwg.mxu0
      %399 = vmatpush.bf16.msra.mxu0 0
      %400 = vmatpush.bf16.msra.mxu0 0
      %401 = vmatpush.bf16.msra.mxu0 0
      %402 = vmatpush.bf16.msra.mxu0 0
      %403 = vmatpush.bf16.msra.mxu0 %v307
      %404 = vmatpush.bf16.msra.mxu0 %v306
      %405 = vmatpush.bf16.msra.mxu0 %v305
      %406 = vmatpush.bf16.msra.mxu0 %v304
      %407 = vmatmul.bf16.gmra.mxu0 %v345
      %v408 = vpop.f32.mrf.mxu0
      %v409 = vadd.f32 %v396, %v408
      %v410 = vpop.f32.mrf.mxu0
      %411 = vdwg.mxu0
      %v412 = vmax.f32 %v409, 0.0
      %v413 = vpack.c.bf16 %v412, %v412
      %s414 = smul.u32 %s29, 32
      %s415 = smul.addr %s414, 4
      %s416 = scalar_lea.vmem %s3, %s415
      %v417 = vld [vmem:[%s416] sm:$0xff]
      %v418 = vld [vmem:[%s416 + $0x8] sm:$0xff]
      %v419 = vld [vmem:[%s416 + $0x10] sm:$0xff]
      %v420 = vld [vmem:[%s416 + $0x18] sm:$0xff]
      %v421 = vld [vmem:[%s416 + $0x20] sm:$0xff]
      %v422 = vld [vmem:[%s416 + $0x28] sm:$0xff]
      %v423 = vld [vmem:[%s416 + $0x30] sm:$0xff]
      %v424 = vld [vmem:[%s416 + $0x38] sm:$0xff]
      %v425 = vld [vmem:[%s416 + $0x40] sm:$0xff]
      %v426 = vld [vmem:[%s416 + $0x48] sm:$0xff]
      %v427 = vld [vmem:[%s416 + $0x50] sm:$0xff]
      %v428 = vld [vmem:[%s416 + $0x58] sm:$0xff]
      %v429 = vld [vmem:[%s416 + $0x60] sm:$0xff]
      %v430 = vld [vmem:[%s416 + $0x68] sm:$0xff]
      %v431 = vld [vmem:[%s416 + $0x70] sm:$0xff]
      %v432 = vld [vmem:[%s416 + $0x78] sm:$0xff]
      %v449 = vunpack.c.l.b16 %v417
      %v450 = vunpack.c.h.b16 %v417
      %v451 = vunpack.c.l.b16 %v418
      %v452 = vunpack.c.h.b16 %v418
      %v453 = vunpack.c.l.b16 %v419
      %v454 = vunpack.c.h.b16 %v419
      %v455 = vunpack.c.l.b16 %v420
      %v456 = vunpack.c.h.b16 %v420
      %v457 = vunpack.c.l.b16 %v421
      %v458 = vunpack.c.h.b16 %v421
      %v459 = vunpack.c.l.b16 %v422
      %v460 = vunpack.c.h.b16 %v422
      %v461 = vunpack.c.l.b16 %v423
      %v462 = vunpack.c.h.b16 %v423
      %v463 = vunpack.c.l.b16 %v424
      %v464 = vunpack.c.h.b16 %v424
      %v465 = vunpack.c.l.b16 %v425
      %v466 = vunpack.c.h.b16 %v425
      %v467 = vunpack.c.l.b16 %v426
      %v468 = vunpack.c.h.b16 %v426
      %v469 = vunpack.c.l.b16 %v427
      %v470 = vunpack.c.h.b16 %v427
      %v471 = vunpack.c.l.b16 %v428
      %v472 = vunpack.c.h.b16 %v428
      %v473 = vunpack.c.l.b16 %v429
      %v474 = vunpack.c.h.b16 %v429
      %v475 = vunpack.c.l.b16 %v430
      %v476 = vunpack.c.h.b16 %v430
      %v477 = vunpack.c.l.b16 %v431
      %v478 = vunpack.c.h.b16 %v431
      %v479 = vunpack.c.l.b16 %v432
      %v480 = vunpack.c.h.b16 %v432
      %v481 = vpack.c.b16 %v453, %v449
      %v482 = vpack.c.b16 %v454, %v450
      %v483 = vpack.c.b16 %v455, %v451
      %v484 = vpack.c.b16 %v456, %v452
      %v485 = vpack.c.b16 %v461, %v457
      %v486 = vpack.c.b16 %v462, %v458
      %v487 = vpack.c.b16 %v463, %v459
      %v488 = vpack.c.b16 %v464, %v460
      %v489 = vpack.c.b16 %v469, %v465
      %v490 = vpack.c.b16 %v470, %v466
      %v491 = vpack.c.b16 %v471, %v467
      %v492 = vpack.c.b16 %v472, %v468
      %v493 = vpack.c.b16 %v477, %v473
      %v494 = vpack.c.b16 %v478, %v474
      %v495 = vpack.c.b16 %v479, %v475
      %v496 = vpack.c.b16 %v480, %v476
      %v514 = vsel %vm344, %v413, 0
      %516 = vmatpush.bf16.msra.mxu0 0
      %517 = vmatpush.bf16.msra.mxu0 0
      %518 = vmatpush.bf16.msra.mxu0 0
      %519 = vmatpush.bf16.msra.mxu0 0
      %520 = vmatpush.bf16.msra.mxu0 %v493
      %521 = vmatpush.bf16.msra.mxu0 %v489
      %522 = vmatpush.bf16.msra.mxu0 %v485
      %523 = vmatpush.bf16.msra.mxu0 %v481
      %524 = vmatmul.bf16.gmra.mxu0 %v514
      %v525 = vpop.f32.mrf.mxu0
      %v526 = vadd.f32 0.0, %v525
      %v527 = vpop.f32.mrf.mxu0
      %528 = vdwg.mxu0
      %529 = vmatpush.bf16.msra.mxu0 0
      %530 = vmatpush.bf16.msra.mxu0 0
      %531 = vmatpush.bf16.msra.mxu0 0
      %532 = vmatpush.bf16.msra.mxu0 0
      %533 = vmatpush.bf16.msra.mxu0 %v494
      %534 = vmatpush.bf16.msra.mxu0 %v490
      %535 = vmatpush.bf16.msra.mxu0 %v486
      %536 = vmatpush.bf16.msra.mxu0 %v482
      %537 = vmatmul.bf16.gmra.mxu0 %v514
      %v538 = vpop.f32.mrf.mxu0
      %v539 = vadd.f32 0.0, %v538
      %v540 = vpop.f32.mrf.mxu0
      %541 = vdwg.mxu0
      %542 = vmatpush.bf16.msra.mxu0 0
      %543 = vmatpush.bf16.msra.mxu0 0
      %544 = vmatpush.bf16.msra.mxu0 0
      %545 = vmatpush.bf16.msra.mxu0 0
      %546 = vmatpush.bf16.msra.mxu0 %v495
      %547 = vmatpush.bf16.msra.mxu0 %v491
      %548 = vmatpush.bf16.msra.mxu0 %v487
      %549 = vmatpush.bf16.msra.mxu0 %v483
      %550 = vmatmul.bf16.gmra.mxu0 %v514
      %v551 = vpop.f32.mrf.mxu0
      %v552 = vadd.f32 0.0, %v551
      %v553 = vpop.f32.mrf.mxu0
      %554 = vdwg.mxu0
      %555 = vmatpush.bf16.msra.mxu0 0
      %556 = vmatpush.bf16.msra.mxu0 0
      %557 = vmatpush.bf16.msra.mxu0 0
      %558 = vmatpush.bf16.msra.mxu0 0
      %559 = vmatpush.bf16.msra.mxu0 %v496
      %560 = vmatpush.bf16.msra.mxu0 %v492
      %561 = vmatpush.bf16.msra.mxu0 %v488
      %562 = vmatpush.bf16.msra.mxu0 %v484
      %563 = vmatmul.bf16.gmra.mxu0 %v514
      %v564 = vpop.f32.mrf.mxu0
      %v565 = vadd.f32 0.0, %v564
      %v566 = vpop.f32.mrf.mxu0
      %567 = vdwg.mxu0
      %v568 = vadd.f32 %v34, %v526
      %v569 = vadd.f32 %v35, %v539
      %v570 = vadd.f32 %v36, %v552
      %v571 = vadd.f32 %v37, %v565
    $region34: #{dqn_forward.5} parent=1 // loop_footer
      %s33 = sadd.s32 1, %s29
    $region35: #{dqn_forward.5} parent=1 // loop_footer_branch
      %28 = sbr.rel target = $region31
    $region36: #{dqn_forward.5} parent=1 // loop_exit
      _
    %v572 = vld [vmem:[%s4] sm:$0xf]
    %v574 = vperm.slane %v572, 0
    %v575 = vperm.slane %v572, 1
    %v576 = vperm.slane %v572, 2
    %v577 = vperm.slane %v572, 3
    %v582 = vadd.f32 %v34, %v574
    %v583 = vadd.f32 %v35, %v575
    %v584 = vadd.f32 %v36, %v576
    %v585 = vadd.f32 %v37, %v577
    %vm586 = vcmp.gt.f32.partialorder %v582, 0.0
    %vm587 = vcmp.gt.f32.partialorder %v583, 0.0
    %vm588 = vcmp.gt.f32.partialorder %v584, 0.0
    %vm589 = vcmp.gt.f32.partialorder %v585, 0.0
    %v590 = vmul.f32 %v582, 0.01
    %v591 = vmul.f32 %v583, 0.01
    %v592 = vmul.f32 %v584, 0.01
    %v593 = vmul.f32 %v585, 0.01
    %v594 = vsel %vm586, %v582, %v590
    %v595 = vsel %vm587, %v583, %v591
    %v596 = vsel %vm588, %v584, %v592
    %v597 = vsel %vm589, %v585, %v593
    %v598 = vpack.c.bf16 %v594, %v594
    %v599 = vpack.c.bf16 %v595, %v595
    %v600 = vpack.c.bf16 %v596, %v596
    %v601 = vpack.c.bf16 %v597, %v597
    %v602 = vld [vmem:[%s5] sm:$0xf]
    %v603 = vld [vmem:[%s5 + $0x4] sm:$0xf]
    %v604 = vld [vmem:[%s5 + $0x8] sm:$0xf]
    %v605 = vld [vmem:[%s5 + $0xc] sm:$0xf]
    %v606 = vld [vmem:[%s5 + $0x10] sm:$0xf]
    %v607 = vld [vmem:[%s5 + $0x14] sm:$0xf]
    %v608 = vld [vmem:[%s5 + $0x18] sm:$0xf]
    %v609 = vld [vmem:[%s5 + $0x1c] sm:$0xf]
    %v610 = vld [vmem:[%s5 + $0x20] sm:$0xf]
    %v611 = vld [vmem:[%s5 + $0x24] sm:$0xf]
    %v612 = vld [vmem:[%s5 + $0x28] sm:$0xf]
    %v613 = vld [vmem:[%s5 + $0x2c] sm:$0xf]
    %v614 = vld [vmem:[%s5 + $0x30] sm:$0xf]
    %v615 = vld [vmem:[%s5 + $0x34] sm:$0xf]
    %v616 = vld [vmem:[%s5 + $0x38] sm:$0xf]
    %v617 = vld [vmem:[%s5 + $0x3c] sm:$0xf]
    %v618 = vld [vmem:[%s5 + $0x40] sm:$0xf]
    %v619 = vld [vmem:[%s5 + $0x44] sm:$0xf]
    %v620 = vld [vmem:[%s5 + $0x48] sm:$0xf]
    %v621 = vld [vmem:[%s5 + $0x4c] sm:$0xf]
    %v622 = vld [vmem:[%s5 + $0x50] sm:$0xf]
    %v623 = vld [vmem:[%s5 + $0x54] sm:$0xf]
    %v624 = vld [vmem:[%s5 + $0x58] sm:$0xf]
    %v625 = vld [vmem:[%s5 + $0x5c] sm:$0xf]
    %v626 = vld [vmem:[%s5 + $0x60] sm:$0xf]
    %v627 = vld [vmem:[%s5 + $0x64] sm:$0xf]
    %v628 = vld [vmem:[%s5 + $0x68] sm:$0xf]
    %v629 = vld [vmem:[%s5 + $0x6c] sm:$0xf]
    %v630 = vld [vmem:[%s5 + $0x70] sm:$0xf]
    %v631 = vld [vmem:[%s5 + $0x74] sm:$0xf]
    %v632 = vld [vmem:[%s5 + $0x78] sm:$0xf]
    %v633 = vld [vmem:[%s5 + $0x7c] sm:$0xf]
    %v634 = vld [vmem:[%s5 + $0x80] sm:$0xf]
    %v635 = vld [vmem:[%s5 + $0x84] sm:$0xf]
    %v636 = vld [vmem:[%s5 + $0x88] sm:$0xf]
    %v637 = vld [vmem:[%s5 + $0x8c] sm:$0xf]
    %v638 = vld [vmem:[%s5 + $0x90] sm:$0xf]
    %v639 = vld [vmem:[%s5 + $0x94] sm:$0xf]
    %v640 = vld [vmem:[%s5 + $0x98] sm:$0xf]
    %v641 = vld [vmem:[%s5 + $0x9c] sm:$0xf]
    %v642 = vld [vmem:[%s5 + $0xa0] sm:$0xf]
    %v643 = vld [vmem:[%s5 + $0xa4] sm:$0xf]
    %v644 = vld [vmem:[%s5 + $0xa8] sm:$0xf]
    %v645 = vld [vmem:[%s5 + $0xac] sm:$0xf]
    %v646 = vld [vmem:[%s5 + $0xb0] sm:$0xf]
    %v647 = vld [vmem:[%s5 + $0xb4] sm:$0xf]
    %v648 = vld [vmem:[%s5 + $0xb8] sm:$0xf]
    %v649 = vld [vmem:[%s5 + $0xbc] sm:$0xf]
    %v650 = vld [vmem:[%s5 + $0xc0] sm:$0xf]
    %v651 = vld [vmem:[%s5 + $0xc4] sm:$0xf]
    %v652 = vld [vmem:[%s5 + $0xc8] sm:$0xf]
    %v653 = vld [vmem:[%s5 + $0xcc] sm:$0xf]
    %v654 = vld [vmem:[%s5 + $0xd0] sm:$0xf]
    %v655 = vld [vmem:[%s5 + $0xd4] sm:$0xf]
    %v656 = vld [vmem:[%s5 + $0xd8] sm:$0xf]
    %v657 = vld [vmem:[%s5 + $0xdc] sm:$0xf]
    %v658 = vld [vmem:[%s5 + $0xe0] sm:$0xf]
    %v659 = vld [vmem:[%s5 + $0xe4] sm:$0xf]
    %v660 = vld [vmem:[%s5 + $0xe8] sm:$0xf]
    %v661 = vld [vmem:[%s5 + $0xec] sm:$0xf]
    %v662 = vld [vmem:[%s5 + $0xf0] sm:$0xf]
    %v663 = vld [vmem:[%s5 + $0xf4] sm:$0xf]
    %v664 = vld [vmem:[%s5 + $0xf8] sm:$0xf]
    %v665 = vld [vmem:[%s5 + $0xfc] sm:$0xf]
    %v666 = vld [vmem:[%s6] sm:$0x1]
    %v668 = vperm.slane %v666, 0
    %v734 = vunpack.c.l.b16 %v602
    %v735 = vunpack.c.l.b16 %v603
    %v736 = vunpack.c.l.b16 %v604
    %v737 = vunpack.c.l.b16 %v605
    %v738 = vunpack.c.l.b16 %v606
    %v739 = vunpack.c.l.b16 %v607
    %v740 = vunpack.c.l.b16 %v608
    %v741 = vunpack.c.l.b16 %v609
    %v742 = vunpack.c.l.b16 %v610
    %v743 = vunpack.c.l.b16 %v611
    %v744 = vunpack.c.l.b16 %v612
    %v745 = vunpack.c.l.b16 %v613
    %v746 = vunpack.c.l.b16 %v614
    %v747 = vunpack.c.l.b16 %v615
    %v748 = vunpack.c.l.b16 %v616
    %v749 = vunpack.c.l.b16 %v617
    %v750 = vunpack.c.l.b16 %v618
    %v751 = vunpack.c.l.b16 %v619
    %v752 = vunpack.c.l.b16 %v620
    %v753 = vunpack.c.l.b16 %v621
    %v754 = vunpack.c.l.b16 %v622
    %v755 = vunpack.c.l.b16 %v623
    %v756 = vunpack.c.l.b16 %v624
    %v757 = vunpack.c.l.b16 %v625
    %v758 = vunpack.c.l.b16 %v626
    %v759 = vunpack.c.l.b16 %v627
    %v760 = vunpack.c.l.b16 %v628
    %v761 = vunpack.c.l.b16 %v629
    %v762 = vunpack.c.l.b16 %v630
    %v763 = vunpack.c.l.b16 %v631
    %v764 = vunpack.c.l.b16 %v632
    %v765 = vunpack.c.l.b16 %v633
    %v766 = vunpack.c.l.b16 %v634
    %v767 = vunpack.c.l.b16 %v635
    %v768 = vunpack.c.l.b16 %v636
    %v769 = vunpack.c.l.b16 %v637
    %v770 = vunpack.c.l.b16 %v638
    %v771 = vunpack.c.l.b16 %v639
    %v772 = vunpack.c.l.b16 %v640
    %v773 = vunpack.c.l.b16 %v641
    %v774 = vunpack.c.l.b16 %v642
    %v775 = vunpack.c.l.b16 %v643
    %v776 = vunpack.c.l.b16 %v644
    %v777 = vunpack.c.l.b16 %v645
    %v778 = vunpack.c.l.b16 %v646
    %v779 = vunpack.c.l.b16 %v647
    %v780 = vunpack.c.l.b16 %v648
    %v781 = vunpack.c.l.b16 %v649
    %v782 = vunpack.c.l.b16 %v650
    %v783 = vunpack.c.l.b16 %v651
    %v784 = vunpack.c.l.b16 %v652
    %v785 = vunpack.c.l.b16 %v653
    %v786 = vunpack.c.l.b16 %v654
    %v787 = vunpack.c.l.b16 %v655
    %v788 = vunpack.c.l.b16 %v656
    %v789 = vunpack.c.l.b16 %v657
    %v790 = vunpack.c.l.b16 %v658
    %v791 = vunpack.c.l.b16 %v659
    %v792 = vunpack.c.l.b16 %v660
    %v793 = vunpack.c.l.b16 %v661
    %v794 = vunpack.c.l.b16 %v662
    %v795 = vunpack.c.l.b16 %v663
    %v796 = vunpack.c.l.b16 %v664
    %v797 = vunpack.c.l.b16 %v665
    %v798 = vpack.c.b16 %v735, %v734
    %v799 = vpack.c.b16 %v737, %v736
    %v800 = vpack.c.b16 %v739, %v738
    %v801 = vpack.c.b16 %v741, %v740
    %v802 = vpack.c.b16 %v743, %v742
    %v803 = vpack.c.b16 %v745, %v744
    %v804 = vpack.c.b16 %v747, %v746
    %v805 = vpack.c.b16 %v749, %v748
    %v806 = vpack.c.b16 %v751, %v750
    %v807 = vpack.c.b16 %v753, %v752
    %v808 = vpack.c.b16 %v755, %v754
    %v809 = vpack.c.b16 %v757, %v756
    %v810 = vpack.c.b16 %v759, %v758
    %v811 = vpack.c.b16 %v761, %v760
    %v812 = vpack.c.b16 %v763, %v762
    %v813 = vpack.c.b16 %v765, %v764
    %v814 = vpack.c.b16 %v767, %v766
    %v815 = vpack.c.b16 %v769, %v768
    %v816 = vpack.c.b16 %v771, %v770
    %v817 = vpack.c.b16 %v773, %v772
    %v818 = vpack.c.b16 %v775, %v774
    %v819 = vpack.c.b16 %v777, %v776
    %v820 = vpack.c.b16 %v779, %v778
    %v821 = vpack.c.b16 %v781, %v780
    %v822 = vpack.c.b16 %v783, %v782
    %v823 = vpack.c.b16 %v785, %v784
    %v824 = vpack.c.b16 %v787, %v786
    %v825 = vpack.c.b16 %v789, %v788
    %v826 = vpack.c.b16 %v791, %v790
    %v827 = vpack.c.b16 %v793, %v792
    %v828 = vpack.c.b16 %v795, %v794
    %v829 = vpack.c.b16 %v797, %v796
    %862 = vmatpush.bf16.msra.mxu0 %v805
    %863 = vmatpush.bf16.msra.mxu0 %v804
    %864 = vmatpush.bf16.msra.mxu0 %v803
    %865 = vmatpush.bf16.msra.mxu0 %v802
    %866 = vmatpush.bf16.msra.mxu0 %v801
    %867 = vmatpush.bf16.msra.mxu0 %v800
    %868 = vmatpush.bf16.msra.mxu0 %v799
    %869 = vmatpush.bf16.msra.mxu0 %v798
    %870 = vmatmul.bf16.gmra.mxu0 %v598
    %v871 = vpop.f32.mrf.mxu0
    %v872 = vadd.f32 %v668, %v871
    %v873 = vpop.f32.mrf.mxu0
    %874 = vdwg.mxu0
    %875 = vmatpush.bf16.msra.mxu0 %v813
    %876 = vmatpush.bf16.msra.mxu0 %v812
    %877 = vmatpush.bf16.msra.mxu0 %v811
    %878 = vmatpush.bf16.msra.mxu0 %v810
    %879 = vmatpush.bf16.msra.mxu0 %v809
    %880 = vmatpush.bf16.msra.mxu0 %v808
    %881 = vmatpush.bf16.msra.mxu0 %v807
    %882 = vmatpush.bf16.msra.mxu0 %v806
    %883 = vmatmul.bf16.gmra.mxu0 %v599
    %v884 = vpop.f32.mrf.mxu0
    %v885 = vadd.f32 %v872, %v884
    %v886 = vpop.f32.mrf.mxu0
    %887 = vdwg.mxu0
    %888 = vmatpush.bf16.msra.mxu0 %v821
    %889 = vmatpush.bf16.msra.mxu0 %v820
    %890 = vmatpush.bf16.msra.mxu0 %v819
    %891 = vmatpush.bf16.msra.mxu0 %v818
    %892 = vmatpush.bf16.msra.mxu0 %v817
    %893 = vmatpush.bf16.msra.mxu0 %v816
    %894 = vmatpush.bf16.msra.mxu0 %v815
    %895 = vmatpush.bf16.msra.mxu0 %v814
    %896 = vmatmul.bf16.gmra.mxu0 %v600
    %v897 = vpop.f32.mrf.mxu0
    %v898 = vadd.f32 %v885, %v897
    %v899 = vpop.f32.mrf.mxu0
    %900 = vdwg.mxu0
    %901 = vmatpush.bf16.msra.mxu0 %v829
    %902 = vmatpush.bf16.msra.mxu0 %v828
    %903 = vmatpush.bf16.msra.mxu0 %v827
    %904 = vmatpush.bf16.msra.mxu0 %v826
    %905 = vmatpush.bf16.msra.mxu0 %v825
    %906 = vmatpush.bf16.msra.mxu0 %v824
    %907 = vmatpush.bf16.msra.mxu0 %v823
    %908 = vmatpush.bf16.msra.mxu0 %v822
    %909 = vmatmul.bf16.gmra.mxu0 %v601
    %v910 = vpop.f32.mrf.mxu0
    %v911 = vadd.f32 %v898, %v910
    %v912 = vpop.f32.mrf.mxu0
    %913 = vdwg.mxu0
    %914 = vst [vmem:[#allocation2] sm:$0x3] %v911
    // Predicated region
    $region37: #{dqn_forward.5} parent=1 // pred_check
      _
    $region38: #{dqn_forward.5} parent=1 // pred_check_branch
      %916 = sbr.rel (0) target = $region40
    $region39: #{dqn_forward.5} parent=1 // pred_region
      %918 = vsyncadd [#allocation3], 0
      %s920 = sshll.u32 [#allocation2], 4
      %s921 = int_to_ptr.vmem [resolvable:$true] %s920
      %s922 = sshll.u32 %s7, 4
      %s923 = int_to_ptr.hbm [resolvable:$true] %s922
      %925 = dma.vmem_to_hbm [thread:$0]  %s921, 32, %s923, [#allocation3]
    $region40: #{dqn_forward.5} parent=1 // pred_fallthru
      _
    // Predicated region
    $region41: #{dqn_forward.5} parent=1 // pred_check
      _
    $region42: #{dqn_forward.5} parent=1 // pred_check_branch
      %927 = sbr.rel (0) target = $region44
    $region43: #{dqn_forward.5} parent=1 // pred_region
      %929 = dma.done [#allocation3], 32
    $region44: #{dqn_forward.5} parent=1 // pred_fallthru
      _
    %930 = vsyncpa [#allocation3], 1

</llo_original>
